<compile_context>
chip_gen: v5e
topology: v5e:2x2
jax: 0.10.0
libtpu: 0.0.40
codegen_flags: <defaults>
</compile_context>

<pallas_src>
import functools

import jax
import jax.numpy as jnp
from jax.experimental import pallas as pl
from jax.experimental.pallas import tpu as pltpu

NUM_FILTERS = 8          # Encoder.num_filters
FEATURE_DIM = 8          # Encoder.feature_dim (== num_filters after global avg pool)
NUM_CONV_LAYERS = 4
RF = 2 ** NUM_CONV_LAYERS        # receptive field of the conv stack = 16
HEAD_WIDTH = 256                 # mu in lanes [0:128), std in lanes [128:256)


# ----------------------------- Pallas kernel -------------------------------- #

def fused_actor_kernel(*refs, conv_out_lanes, log_std_min, log_std_max, has_row_pool):
    if has_row_pool:
        (x_ref, others_ref, wc0, wc1, wc2, wc3,
         bias_ref, w1_ref, w2_ref, w3_ref, pool_ref, out_ref) = refs
    else:
        (x_ref, others_ref, wc0, wc1, wc2, wc3,
         bias_ref, w1_ref, w2_ref, w3_ref, out_ref) = refs
        pool_ref = None
    conv_w_refs = (wc0, wc1, wc2, wc3)

    # --- Encoder: 4 x [Conv2d(2, stride=2) + ReLU], ONE bf16 matmul per layer ---
    x = x_ref[...]                                   # (B*hf, 16*W*C) bf16
    for l, n_out in enumerate(conv_out_lanes):
        z = jnp.dot(x, conv_w_refs[l][...], preferred_element_type=jnp.float32)
        z = z + bias_ref[l:l + 1, 0:n_out]
        x = jnp.maximum(z, 0.0).astype(jnp.bfloat16)

    nb = NUM_CONV_LAYERS

    # --- adaptive_avg_pool2d((1,1)): h'-pool (only when H > 16); w'/c pool + the
    #     1/(H'*W') scale are already folded into w1 in the wrapper ---
    if pool_ref is not None:
        x = jnp.dot(pool_ref[...], x, preferred_element_type=jnp.float32).astype(jnp.bfloat16)

    # --- trunk Linear #1: pooled features and `others` in a single matmul + ReLU ---
    h = jnp.concatenate([x, others_ref[...]], axis=1)        # (B, wf*NF + 4) bf16
    h1_w = w1_ref.shape[1]
    h = jnp.dot(h, w1_ref[...], preferred_element_type=jnp.float32) + bias_ref[nb:nb + 1, 0:h1_w]
    h = jnp.maximum(h, 0.0).astype(jnp.bfloat16)

    # --- trunk Linear #2 + ReLU ---
    h2_w = w2_ref.shape[1]
    h = jnp.dot(h, w2_ref[...], preferred_element_type=jnp.float32) + bias_ref[nb + 1:nb + 2, 0:h2_w]
    h = jnp.maximum(h, 0.0).astype(jnp.bfloat16)

    # --- merged mu / log_std head: one matmul, two static 128-lane output slices ---
    t = jnp.dot(h, w3_ref[...], preferred_element_type=jnp.float32) + bias_ref[nb + 2:nb + 3, 0:HEAD_WIDTH]
    ls = jnp.tanh(t[:, 128:HEAD_WIDTH])
    ls = log_std_min + 0.5 * (log_std_max - log_std_min) * (ls + 1.0)
    out_ref[:, 0:128] = t[:, 0:128]                  # mu (zero-padded to 128 lanes)
    out_ref[:, 128:HEAD_WIDTH] = jnp.exp(ls)         # std


# -------------------------------- wrapper ----------------------------------- #

def actor_forward(obs, others, params, log_std_bounds):
    B, C, H, W = obs.shape
    assert H % RF == 0 and W % RF == 0, (
        "H and W must be divisible by 2**num_layers to match the PyTorch conv/pool chain")
    hf, wf = H // RF, W // RF

    # Single model-boundary layout change: NCHW -> rows=(b, h//16), lanes=(h%16, w, c).
    # TODO(synk): at large batch, produce obs in NHWC upstream (or relayout in-kernel)
    # to avoid this whole-tensor HBM transpose.
    x0 = (jnp.transpose(obs, (0, 2, 3, 1))
          .reshape(B * hf, RF * W * C)
          .astype(jnp.bfloat16))

    # Build per-layer block-sparse conv weights: both the dy (row) and dx (col)
    # stride-2 selection are folded into the weight, so each layer is one matmul.
    conv_ws, conv_bs, conv_out_lanes = [], [], []
    s_l, w_l, c_l = RF, W, C
    for (wt, bias) in params["convs"]:               # wt: (Cout, Cin, 2, 2) PyTorch layout
        cout = wt.shape[0]
        s_o, w_o = s_l // 2, w_l // 2
        selh = (jnp.arange(s_l)[:, None, None]
                == 2 * jnp.arange(s_o)[None, :, None] + jnp.arange(2)[None, None, :]
                ).astype(jnp.float32)                # (s_l, s_o, dy)
        selw = (jnp.arange(w_l)[:, None, None]
                == 2 * jnp.arange(w_o)[None, :, None] + jnp.arange(2)[None, None, :]
                ).astype(jnp.float32)                # (w_l, w_o, dx)
        M = jnp.einsum("apy,uqx,oiyx->auipqo", selh, selw, wt.astype(jnp.float32))
        M = M.reshape(s_l * w_l * c_l, s_o * w_o * cout)
        conv_ws.append(M.astype(jnp.bfloat16))
        conv_bs.append(jnp.tile(bias, s_o * w_o).astype(jnp.float32))
        conv_out_lanes.append(s_o * w_o * cout)
        s_l, w_l, c_l = s_o, w_o, cout
    assert s_l == 1 and w_l == wf

    # Fold the w'/channel average pool (and 1/(hf*wf) scale) plus the `others`
    # slice of trunk Linear #1 into one matrix -> single trunk-L1 matmul.
    w1, b1 = params["w1"], params["b1"]
    w1_feat = jnp.tile(w1[:c_l, :], (wf, 1)) / float(hf * wf)
    w1_cat = jnp.concatenate([w1_feat, w1[c_l:, :]], axis=0).astype(jnp.bfloat16)

    # Merged head: mu columns at lanes [0:A), log_std columns at lanes [128:128+A).
    A = params["w3"].shape[1] // 2
    assert A <= 128
    w3, b3 = params["w3"], params["b3"]
    w3_m = (jnp.zeros((w3.shape[0], HEAD_WIDTH), jnp.float32)
            .at[:, :A].set(w3[:, :A])
            .at[:, 128:128 + A].set(w3[:, A:]))
    b3_m = (jnp.zeros((HEAD_WIDTH,), jnp.float32)
            .at[:A].set(b3[:A])
            .at[128:128 + A].set(b3[A:]))

    # Pack every bias into a single f32 slab (one operand instead of seven).
    bias_rows = conv_bs + [b1, params["b2"], b3_m]
    bw = max(int(r.shape[0]) for r in bias_rows)
    bias_slab = jnp.stack([jnp.pad(r, (0, bw - r.shape[0])) for r in bias_rows],
                          axis=0).astype(jnp.float32)

    operands = [x0, others.astype(jnp.bfloat16),
                conv_ws[0], conv_ws[1], conv_ws[2], conv_ws[3],
                bias_slab, w1_cat,
                params["w2"].astype(jnp.bfloat16),
                w3_m.astype(jnp.bfloat16)]
    has_row_pool = hf > 1
    if has_row_pool:     # h'-direction average pool (precomputed 0/1 matrix, scale is in w1)
        pool = (jnp.arange(B)[:, None] == jnp.arange(B * hf)[None, :] // hf).astype(jnp.bfloat16)
        operands.append(pool)

    kernel = functools.partial(
        fused_actor_kernel,
        conv_out_lanes=tuple(conv_out_lanes),
        log_std_min=float(log_std_bounds[0]),
        log_std_max=float(log_std_bounds[1]),
        has_row_pool=has_row_pool,
    )
    vmem = pl.BlockSpec(memory_space=pltpu.MemorySpace.VMEM)
    out = pl.pallas_call(
        kernel,
        out_shape=jax.ShapeDtypeStruct((B, HEAD_WIDTH), jnp.float32),
        in_specs=[vmem] * len(operands),
        out_specs=vmem,
    )(*operands)

    mu = out[:, :A]
    std = out[:, 128:128 + A]
    # TODO(synk): utils.SquashedNormal (tanh-transformed Normal distribution
    # object) has no Pallas equivalent; we return its parameters (mu, std).
    return mu, std


# --------------------------- parameter creation ------------------------------ #

def init_params(key, obs_shape, action_shape):
    C = obs_shape[0]
    A = action_shape[0]
    keys = jax.random.split(key, 8)

    def w(k, shape, fan_in):
        return jax.random.normal(k, shape, jnp.float32) / jnp.sqrt(jnp.float32(fan_in))

    convs = []
    cin = C
    for i in range(NUM_CONV_LAYERS):   # Conv2d(cin, 8, 2, stride=2)
        convs.append((w(keys[i], (NUM_FILTERS, cin, 2, 2), cin * 4),
                      jnp.zeros((NUM_FILTERS,), jnp.float32)))
        cin = NUM_FILTERS

    return {
        "convs": convs,
        # trunk: Linear(feature_dim+4, 64), ReLU, Linear(64, 32), ReLU, Linear(32, 2*A)
        "w1": w(keys[4], (FEATURE_DIM + 4, 64), FEATURE_DIM + 4),
        "b1": jnp.zeros((64,), jnp.float32),
        "w2": w(keys[5], (64, 32), 64),
        "b2": jnp.zeros((32,), jnp.float32),
        "w3": w(keys[6], (32, 2 * A), 32),
        "b3": jnp.zeros((2 * A,), jnp.float32),
    }


if __name__ == "__main__":
    obs_shape = (4, 16, 16)          # (C, H, W); 16 -> 8 -> 4 -> 2 -> 1 through the 4 convs
    action_shape = (3,)
    log_std_bounds = (-10.0, 2.0)
    batch = 2

    params = init_params(jax.random.PRNGKey(0), obs_shape, action_shape)

    k_obs, k_oth = jax.random.split(jax.random.PRNGKey(0), 2)
    obs = jax.random.normal(k_obs, (batch,) + obs_shape, dtype=jnp.float32)
    others = jax.random.normal(k_oth, (batch, 4), dtype=jnp.float32)

    mu, std = actor_forward(obs, others, params, log_std_bounds)
    jax.block_until_ready((mu, std))
    print("KERNEL_OK")
</pallas_src>

<mosaic_0001>
module attributes {stable_mosaic.version = 11 : i64} {
  func.func @fused_actor_kernel(%arg0: memref<2x1024xbf16, #tpu.memory_space<vmem>>, %arg1: memref<2x4xbf16, #tpu.memory_space<vmem>>, %arg2: memref<1024x512xbf16, #tpu.memory_space<vmem>>, %arg3: memref<512x128xbf16, #tpu.memory_space<vmem>>, %arg4: memref<128x32xbf16, #tpu.memory_space<vmem>>, %arg5: memref<32x8xbf16, #tpu.memory_space<vmem>>, %arg6: memref<7x512xf32, #tpu.memory_space<vmem>>, %arg7: memref<12x64xbf16, #tpu.memory_space<vmem>>, %arg8: memref<64x32xbf16, #tpu.memory_space<vmem>>, %arg9: memref<32x256xbf16, #tpu.memory_space<vmem>>, %arg10: memref<2x256xf32, #tpu.memory_space<vmem>>) attributes {dimension_semantics = [], scalar_prefetch = 0 : i64, scratch_operands = 0 : i64, tpu.core_type = #tpu.core_type<tc>} {
    %c0 = arith.constant 0 : index
    %c0_0 = arith.constant 0 : index
    %0 = vector.load %arg0[%c0, %c0_0] : memref<2x1024xbf16, #tpu.memory_space<vmem>>, vector<2x1024xbf16>
    %c0_1 = arith.constant 0 : index
    %c0_2 = arith.constant 0 : index
    %1 = vector.load %arg2[%c0_1, %c0_2] : memref<1024x512xbf16, #tpu.memory_space<vmem>>, vector<1024x512xbf16>
    %cst = arith.constant dense<0.000000e+00> : vector<2x512xf32>
    %2 = tpu.matmul %0, %1, %cst {dimension_numbers = #tpu.dot_dimension_numbers<[1], [0], [0], [1], [0, 0, 1, 1], [], []>} : vector<2x1024xbf16>, vector<1024x512xbf16>, vector<2x512xf32> -> vector<2x512xf32>
    %c0_3 = arith.constant 0 : index
    %c0_4 = arith.constant 0 : index
    %3 = vector.load %arg6[%c0_3, %c0_4] : memref<7x512xf32, #tpu.memory_space<vmem>>, vector<1x512xf32>
    %4 = vector.broadcast %3 : vector<1x512xf32> to vector<2x512xf32>
    %5 = arith.addf %2, %4 : vector<2x512xf32>
    %cst_5 = arith.constant 0.000000e+00 : f32
    %6 = vector.broadcast %cst_5 : f32 to vector<2x512xf32>
    %7 = arith.maximumf %5, %6 : vector<2x512xf32>
    %8 = arith.truncf %7 : vector<2x512xf32> to vector<2x512xbf16>
    %c0_6 = arith.constant 0 : index
    %c0_7 = arith.constant 0 : index
    %9 = vector.load %arg3[%c0_6, %c0_7] : memref<512x128xbf16, #tpu.memory_space<vmem>>, vector<512x128xbf16>
    %cst_8 = arith.constant dense<0.000000e+00> : vector<2x128xf32>
    %10 = tpu.matmul %8, %9, %cst_8 {dimension_numbers = #tpu.dot_dimension_numbers<[1], [0], [0], [1], [0, 0, 1, 1], [], []>} : vector<2x512xbf16>, vector<512x128xbf16>, vector<2x128xf32> -> vector<2x128xf32>
    %c1 = arith.constant 1 : index
    %c0_9 = arith.constant 0 : index
    %11 = vector.load %arg6[%c1, %c0_9] : memref<7x512xf32, #tpu.memory_space<vmem>>, vector<1x128xf32>
    %12 = vector.broadcast %11 : vector<1x128xf32> to vector<2x128xf32>
    %13 = arith.addf %10, %12 : vector<2x128xf32>
    %cst_10 = arith.constant 0.000000e+00 : f32
    %14 = vector.broadcast %cst_10 : f32 to vector<2x128xf32>
    %15 = arith.maximumf %13, %14 : vector<2x128xf32>
    %16 = arith.truncf %15 : vector<2x128xf32> to vector<2x128xbf16>
    %c0_11 = arith.constant 0 : index
    %c0_12 = arith.constant 0 : index
    %17 = vector.load %arg4[%c0_11, %c0_12] : memref<128x32xbf16, #tpu.memory_space<vmem>>, vector<128x32xbf16>
    %cst_13 = arith.constant dense<0.000000e+00> : vector<2x32xf32>
    %18 = tpu.matmul %16, %17, %cst_13 {dimension_numbers = #tpu.dot_dimension_numbers<[1], [0], [0], [1], [0, 0, 1, 1], [], []>} : vector<2x128xbf16>, vector<128x32xbf16>, vector<2x32xf32> -> vector<2x32xf32>
    %c2 = arith.constant 2 : index
    %c0_14 = arith.constant 0 : index
    %19 = vector.load %arg6[%c2, %c0_14] : memref<7x512xf32, #tpu.memory_space<vmem>>, vector<1x32xf32>
    %20 = vector.broadcast %19 : vector<1x32xf32> to vector<2x32xf32>
    %21 = arith.addf %18, %20 : vector<2x32xf32>
    %cst_15 = arith.constant 0.000000e+00 : f32
    %22 = vector.broadcast %cst_15 : f32 to vector<2x32xf32>
    %23 = arith.maximumf %21, %22 : vector<2x32xf32>
    %24 = arith.truncf %23 : vector<2x32xf32> to vector<2x32xbf16>
    %c0_16 = arith.constant 0 : index
    %c0_17 = arith.constant 0 : index
    %25 = vector.load %arg5[%c0_16, %c0_17] : memref<32x8xbf16, #tpu.memory_space<vmem>>, vector<32x8xbf16>
    %cst_18 = arith.constant dense<0.000000e+00> : vector<2x8xf32>
    %26 = tpu.matmul %24, %25, %cst_18 {dimension_numbers = #tpu.dot_dimension_numbers<[1], [0], [0], [1], [0, 0, 1, 1], [], []>} : vector<2x32xbf16>, vector<32x8xbf16>, vector<2x8xf32> -> vector<2x8xf32>
    %c3 = arith.constant 3 : index
    %c0_19 = arith.constant 0 : index
    %27 = vector.load %arg6[%c3, %c0_19] : memref<7x512xf32, #tpu.memory_space<vmem>>, vector<1x8xf32>
    %28 = vector.broadcast %27 : vector<1x8xf32> to vector<2x8xf32>
    %29 = arith.addf %26, %28 : vector<2x8xf32>
    %cst_20 = arith.constant 0.000000e+00 : f32
    %30 = vector.broadcast %cst_20 : f32 to vector<2x8xf32>
    %31 = arith.maximumf %29, %30 : vector<2x8xf32>
    %32 = arith.truncf %31 : vector<2x8xf32> to vector<2x8xbf16>
    %c0_21 = arith.constant 0 : index
    %c0_22 = arith.constant 0 : index
    %33 = vector.load %arg1[%c0_21, %c0_22] : memref<2x4xbf16, #tpu.memory_space<vmem>>, vector<2x4xbf16>
    %34 = tpu.concatenate %32, %33 in 1 : vector<2x8xbf16>, vector<2x4xbf16> -> vector<2x12xbf16>
    %c0_23 = arith.constant 0 : index
    %c0_24 = arith.constant 0 : index
    %35 = vector.load %arg7[%c0_23, %c0_24] : memref<12x64xbf16, #tpu.memory_space<vmem>>, vector<12x64xbf16>
    %cst_25 = arith.constant dense<0.000000e+00> : vector<2x64xf32>
    %36 = tpu.matmul %34, %35, %cst_25 {dimension_numbers = #tpu.dot_dimension_numbers<[1], [0], [0], [1], [0, 0, 1, 1], [], []>} : vector<2x12xbf16>, vector<12x64xbf16>, vector<2x64xf32> -> vector<2x64xf32>
    %c4 = arith.constant 4 : index
    %c0_26 = arith.constant 0 : index
    %37 = vector.load %arg6[%c4, %c0_26] : memref<7x512xf32, #tpu.memory_space<vmem>>, vector<1x64xf32>
    %38 = vector.broadcast %37 : vector<1x64xf32> to vector<2x64xf32>
    %39 = arith.addf %36, %38 : vector<2x64xf32>
    %cst_27 = arith.constant 0.000000e+00 : f32
    %40 = vector.broadcast %cst_27 : f32 to vector<2x64xf32>
    %41 = arith.maximumf %39, %40 : vector<2x64xf32>
    %42 = arith.truncf %41 : vector<2x64xf32> to vector<2x64xbf16>
    %c0_28 = arith.constant 0 : index
    %c0_29 = arith.constant 0 : index
    %43 = vector.load %arg8[%c0_28, %c0_29] : memref<64x32xbf16, #tpu.memory_space<vmem>>, vector<64x32xbf16>
    %cst_30 = arith.constant dense<0.000000e+00> : vector<2x32xf32>
    %44 = tpu.matmul %42, %43, %cst_30 {dimension_numbers = #tpu.dot_dimension_numbers<[1], [0], [0], [1], [0, 0, 1, 1], [], []>} : vector<2x64xbf16>, vector<64x32xbf16>, vector<2x32xf32> -> vector<2x32xf32>
    %c5 = arith.constant 5 : index
    %c0_31 = arith.constant 0 : index
    %45 = vector.load %arg6[%c5, %c0_31] : memref<7x512xf32, #tpu.memory_space<vmem>>, vector<1x32xf32>
    %46 = vector.broadcast %45 : vector<1x32xf32> to vector<2x32xf32>
    %47 = arith.addf %44, %46 : vector<2x32xf32>
    %cst_32 = arith.constant 0.000000e+00 : f32
    %48 = vector.broadcast %cst_32 : f32 to vector<2x32xf32>
    %49 = arith.maximumf %47, %48 : vector<2x32xf32>
    %50 = arith.truncf %49 : vector<2x32xf32> to vector<2x32xbf16>
    %c0_33 = arith.constant 0 : index
    %c0_34 = arith.constant 0 : index
    %51 = vector.load %arg9[%c0_33, %c0_34] : memref<32x256xbf16, #tpu.memory_space<vmem>>, vector<32x256xbf16>
    %cst_35 = arith.constant dense<0.000000e+00> : vector<2x256xf32>
    %52 = tpu.matmul %50, %51, %cst_35 {dimension_numbers = #tpu.dot_dimension_numbers<[1], [0], [0], [1], [0, 0, 1, 1], [], []>} : vector<2x32xbf16>, vector<32x256xbf16>, vector<2x256xf32> -> vector<2x256xf32>
    %c6 = arith.constant 6 : index
    %c0_36 = arith.constant 0 : index
    %53 = vector.load %arg6[%c6, %c0_36] : memref<7x512xf32, #tpu.memory_space<vmem>>, vector<1x256xf32>
    %54 = vector.broadcast %53 : vector<1x256xf32> to vector<2x256xf32>
    %55 = arith.addf %52, %54 : vector<2x256xf32>
    %56 = vector.extract_strided_slice %55 {offsets = [0, 128], sizes = [2, 128], strides = [1, 1]} : vector<2x256xf32> to vector<2x128xf32>
    %57 = math.tanh %56 : vector<2x128xf32>
    %cst_37 = arith.constant 1.000000e+00 : f32
    %58 = vector.broadcast %cst_37 : f32 to vector<2x128xf32>
    %59 = arith.addf %57, %58 : vector<2x128xf32>
    %cst_38 = arith.constant 6.000000e+00 : f32
    %60 = vector.broadcast %cst_38 : f32 to vector<2x128xf32>
    %61 = arith.mulf %60, %59 : vector<2x128xf32>
    %cst_39 = arith.constant -1.000000e+01 : f32
    %62 = vector.broadcast %cst_39 : f32 to vector<2x128xf32>
    %63 = arith.addf %62, %61 : vector<2x128xf32>
    %64 = vector.extract_strided_slice %55 {offsets = [0, 0], sizes = [2, 128], strides = [1, 1]} : vector<2x256xf32> to vector<2x128xf32>
    %c0_40 = arith.constant 0 : index
    %c0_41 = arith.constant 0 : index
    %65 = vector.load %arg10[%c0_40, %c0_41] : memref<2x256xf32, #tpu.memory_space<vmem>>, vector<2x128xf32>
    tpu.vector_store %arg10[%c0_40, %c0_41], %64 {strides = array<i32>} : memref<2x256xf32, #tpu.memory_space<vmem>>, vector<2x128xf32>,
    %66 = math.exp %63 : vector<2x128xf32>
    %c0_42 = arith.constant 0 : index
    %c128 = arith.constant 128 : index
    %67 = vector.load %arg10[%c0_42, %c128] : memref<2x256xf32, #tpu.memory_space<vmem>>, vector<2x128xf32>
    tpu.vector_store %arg10[%c0_42, %c128], %66 {strides = array<i32>} : memref<2x256xf32, #tpu.memory_space<vmem>>, vector<2x128xf32>,
    return
  }
}

</mosaic_0001>

<llo_original>
// kernel: tpu_custom_call.1
$region0: #{tpu_custom_call.1}
  #allocation0 [shape = 'u32[]', space=smem, size = 0x4, offset = 0x4, fixed_abs, tag = 'smem constant byte address 0x4 - core index']
  #allocation1 [shape = 'u32[72,128]{1,0:T(1,128)}', space=vmem, size = 0x9000, scoped, tag = 'internal scratch']
  %s0 = inlined_call_operand.vmem [shape: bf16[2,1024], index: 0, kind: input, shape index: {}]
  %s1 = inlined_call_operand.vmem [shape: bf16[2,4], index: 1, kind: input, shape index: {}]
  %s2 = inlined_call_operand.hbm [shape: bf16[1024,512], index: 2, kind: input, shape index: {}]
  %s3 = inlined_call_operand.hbm [shape: bf16[512,128], index: 3, kind: input, shape index: {}]
  %s4 = inlined_call_operand.vmem [shape: bf16[128,32], index: 4, kind: input, shape index: {}]
  %s5 = inlined_call_operand.vmem [shape: bf16[32,8], index: 5, kind: input, shape index: {}]
  %s6 = inlined_call_operand.vmem [shape: f32[7,512], index: 6, kind: input, shape index: {}]
  %s7 = inlined_call_operand.vmem [shape: bf16[12,64], index: 7, kind: input, shape index: {}]
  %s8 = inlined_call_operand.vmem [shape: bf16[64,32], index: 8, kind: input, shape index: {}]
  %s9 = inlined_call_operand.vmem [shape: bf16[32,256], index: 9, kind: input, shape index: {}]
  %s10 = inlined_call_operand.hbm [shape: f32[2,256], index: 10, kind: output, shape index: {}]
  %s11 = sld [smem:[#allocation0]]
  $region58: #{tpu_custom_call.1} parent=0
    _
  %s13 = ssub.s32 1, %s11
  %s14 = scalar_select 0, %s13, %s11
  $region1: #{tpu_custom_call.1} parent=0
    #allocation2 [shape = 'u8[1048576]{0}', space=vmem, size = 0x100000, scoped, tag = 'input window, operand 2, single buffered']
    #allocation3 [shape = 's32[1]{0}', space=sflag, size = 0x4, scoped, tag = 'scoped memory for tpu_custom_call.1']
    #allocation4 [shape = 's32[1]{0}', space=sflag, size = 0x4, scoped, tag = 'scoped memory for tpu_custom_call.1']
    #allocation5 [shape = 'u8[131072]{0}', space=vmem, size = 0x20000, scoped, tag = 'input window, operand 3, single buffered']
    #allocation6 [shape = 's32[1]{0}', space=sflag, size = 0x4, scoped, tag = 'scoped memory for tpu_custom_call.1']
    #allocation7 [shape = 'u8[2048]{0}', space=vmem, size = 0x800, scoped, tag = 'output window, operand 0, single buffered']
    %15 = vsyncpa [#allocation3], 0
    %16 = vsyncpa [#allocation6], 0
    %17 = vsyncpa [#allocation4], 0
    // Predicated region
    $region2: #{tpu_custom_call.1} parent=1 // pred_check
      _
    $region3: #{tpu_custom_call.1} parent=1 // pred_check_branch
      %19 = sbr.rel (0) target = $region5
    $region4: #{tpu_custom_call.1} parent=1 // pred_region
      _
    $region5: #{tpu_custom_call.1} parent=1 // pred_fallthru
      _
    // Predicated region
    $region6: #{tpu_custom_call.1} parent=1 // pred_check
      _
    $region7: #{tpu_custom_call.1} parent=1 // pred_check_branch
      %21 = sbr.rel (0) target = $region9
    $region8: #{tpu_custom_call.1} parent=1 // pred_region
      _
    $region9: #{tpu_custom_call.1} parent=1 // pred_fallthru
      _
    // Predicated region
    $region10: #{tpu_custom_call.1} parent=1 // pred_check
      _
    $region11: #{tpu_custom_call.1} parent=1 // pred_check_branch
      %23 = sbr.rel (0) target = $region13
    $region12: #{tpu_custom_call.1} parent=1 // pred_region
      %25 = vsyncadd [#allocation3], 0
      %s26 = sshll.u32 %s2, 4
      %s27 = int_to_ptr.hbm [resolvable:$true] %s26
      %s28 = sshll.u32 [#allocation2], 4
      %s29 = int_to_ptr.vmem [resolvable:$true] %s28
      %34 = dma.hbm_to_vmem [thread:$0]  %s27, 32768, %s29, [#allocation3], 256, 256, 16
    $region13: #{tpu_custom_call.1} parent=1 // pred_fallthru
      _
    // Predicated region
    $region14: #{tpu_custom_call.1} parent=1 // pred_check
      _
    $region15: #{tpu_custom_call.1} parent=1 // pred_check_branch
      %36 = sbr.rel (0) target = $region17
    $region16: #{tpu_custom_call.1} parent=1 // pred_region
      %38 = vsyncadd [#allocation6], 0
      %s39 = sshll.u32 %s3, 4
      %s40 = int_to_ptr.hbm [resolvable:$true] %s39
      %s41 = sshll.u32 [#allocation5], 4
      %s42 = int_to_ptr.vmem [resolvable:$true] %s41
      %47 = dma.hbm_to_vmem [thread:$0]  %s40, 4096, %s42, [#allocation6], 64, 64, 4
    $region17: #{tpu_custom_call.1} parent=1 // pred_fallthru
      _
    // Predicated region
    $region18: #{tpu_custom_call.1} parent=1 // pred_check
      _
    $region19: #{tpu_custom_call.1} parent=1 // pred_check_branch
      %49 = sbr.rel (0) target = $region21
    $region20: #{tpu_custom_call.1} parent=1 // pred_region
      _
    $region21: #{tpu_custom_call.1} parent=1 // pred_fallthru
      _
    // Predicated region
    $region22: #{tpu_custom_call.1} parent=1 // pred_check
      _
    $region23: #{tpu_custom_call.1} parent=1 // pred_check_branch
      %51 = sbr.rel (0) target = $region25
    $region24: #{tpu_custom_call.1} parent=1 // pred_region
      _
    $region25: #{tpu_custom_call.1} parent=1 // pred_fallthru
      _
    // Predicated region
    $region26: #{tpu_custom_call.1} parent=1 // pred_check
      _
    $region27: #{tpu_custom_call.1} parent=1 // pred_check_branch
      %53 = sbr.rel (0) target = $region29
    $region28: #{tpu_custom_call.1} parent=1 // pred_region
      _
    $region29: #{tpu_custom_call.1} parent=1 // pred_fallthru
      _
    // Predicated region
    $region30: #{tpu_custom_call.1} parent=1 // pred_check
      _
    $region31: #{tpu_custom_call.1} parent=1 // pred_check_branch
      %55 = sbr.rel (0) target = $region33
    $region32: #{tpu_custom_call.1} parent=1 // pred_region
      _
    $region33: #{tpu_custom_call.1} parent=1 // pred_fallthru
      _
    // Predicated region
    $region34: #{tpu_custom_call.1} parent=1 // pred_check
      _
    $region35: #{tpu_custom_call.1} parent=1 // pred_check_branch
      %57 = sbr.rel (0) target = $region37
    $region36: #{tpu_custom_call.1} parent=1 // pred_region
      _
    $region37: #{tpu_custom_call.1} parent=1 // pred_fallthru
      _
    // Predicated region
    $region38: #{tpu_custom_call.1} parent=1 // pred_check
      _
    $region39: #{tpu_custom_call.1} parent=1 // pred_check_branch
      %59 = sbr.rel (0) target = $region41
    $region40: #{tpu_custom_call.1} parent=1 // pred_region
      _
    $region41: #{tpu_custom_call.1} parent=1 // pred_fallthru
      _
    // Predicated region
    $region42: #{tpu_custom_call.1} parent=1 // pred_check
      _
    $region43: #{tpu_custom_call.1} parent=1 // pred_check_branch
      %61 = sbr.rel (0) target = $region45
    $region44: #{tpu_custom_call.1} parent=1 // pred_region
      %63 = dma.done [#allocation3], 32768
    $region45: #{tpu_custom_call.1} parent=1 // pred_fallthru
      _
    // Predicated region
    $region46: #{tpu_custom_call.1} parent=1 // pred_check
      _
    $region47: #{tpu_custom_call.1} parent=1 // pred_check_branch
      %65 = sbr.rel (0) target = $region49
    $region48: #{tpu_custom_call.1} parent=1 // pred_region
      %67 = dma.done [#allocation6], 4096
    $region49: #{tpu_custom_call.1} parent=1 // pred_fallthru
      _
    %v69 = vld [vmem:[%s0] sm:$0xff]
    %v70 = vld [vmem:[#allocation2] sm:$0xff]
    %v71 = vld [vmem:[#allocation2 + $0x8] sm:$0xff]
    %v72 = vld [vmem:[#allocation2 + $0x10] sm:$0xff]
    %v73 = vld [vmem:[#allocation2 + $0x18] sm:$0xff]
    %v74 = vld [vmem:[#allocation2 + $0x20] sm:$0xff]
    %v75 = vld [vmem:[#allocation2 + $0x28] sm:$0xff]
    %v76 = vld [vmem:[#allocation2 + $0x30] sm:$0xff]
    %v77 = vld [vmem:[#allocation2 + $0x38] sm:$0xff]
    %v78 = vld [vmem:[#allocation2 + $0x40] sm:$0xff]
    %v79 = vld [vmem:[#allocation2 + $0x48] sm:$0xff]
    %v80 = vld [vmem:[#allocation2 + $0x50] sm:$0xff]
    %v81 = vld [vmem:[#allocation2 + $0x58] sm:$0xff]
    %v82 = vld [vmem:[#allocation2 + $0x60] sm:$0xff]
    %v83 = vld [vmem:[#allocation2 + $0x68] sm:$0xff]
    %v84 = vld [vmem:[#allocation2 + $0x70] sm:$0xff]
    %v85 = vld [vmem:[#allocation2 + $0x78] sm:$0xff]
    %v86 = vld [vmem:[#allocation2 + $0x80] sm:$0xff]
    %v87 = vld [vmem:[#allocation2 + $0x88] sm:$0xff]
    %v88 = vld [vmem:[#allocation2 + $0x90] sm:$0xff]
    %v89 = vld [vmem:[#allocation2 + $0x98] sm:$0xff]
    %v90 = vld [vmem:[#allocation2 + $0xa0] sm:$0xff]
    %v91 = vld [vmem:[#allocation2 + $0xa8] sm:$0xff]
    %v92 = vld [vmem:[#allocation2 + $0xb0] sm:$0xff]
    %v93 = vld [vmem:[#allocation2 + $0xb8] sm:$0xff]
    %v94 = vld [vmem:[#allocation2 + $0xc0] sm:$0xff]
    %v95 = vld [vmem:[#allocation2 + $0xc8] sm:$0xff]
    %v96 = vld [vmem:[#allocation2 + $0xd0] sm:$0xff]
    %v97 = vld [vmem:[#allocation2 + $0xd8] sm:$0xff]
    %v98 = vld [vmem:[#allocation2 + $0xe0] sm:$0xff]
    %v99 = vld [vmem:[#allocation2 + $0xe8] sm:$0xff]
    %v100 = vld [vmem:[#allocation2 + $0xf0] sm:$0xff]
    %v101 = vld [vmem:[#allocation2 + $0xf8] sm:$0xff]
    %v102 = vld [vmem:[#allocation2 + $0x100] sm:$0xff]
    %v103 = vld [vmem:[#allocation2 + $0x108] sm:$0xff]
    %v104 = vld [vmem:[#allocation2 + $0x110] sm:$0xff]
    %v105 = vld [vmem:[#allocation2 + $0x118] sm:$0xff]
    %v106 = vld [vmem:[#allocation2 + $0x120] sm:$0xff]
    %v107 = vld [vmem:[#allocation2 + $0x128] sm:$0xff]
    %v108 = vld [vmem:[#allocation2 + $0x130] sm:$0xff]
    %v109 = vld [vmem:[#allocation2 + $0x138] sm:$0xff]
    %v110 = vld [vmem:[#allocation2 + $0x140] sm:$0xff]
    %v111 = vld [vmem:[#allocation2 + $0x148] sm:$0xff]
    %v112 = vld [vmem:[#allocation2 + $0x150] sm:$0xff]
    %v113 = vld [vmem:[#allocation2 + $0x158] sm:$0xff]
    %v114 = vld [vmem:[#allocation2 + $0x160] sm:$0xff]
    %v115 = vld [vmem:[#allocation2 + $0x168] sm:$0xff]
    %v116 = vld [vmem:[#allocation2 + $0x170] sm:$0xff]
    %v117 = vld [vmem:[#allocation2 + $0x178] sm:$0xff]
    %v118 = vld [vmem:[#allocation2 + $0x180] sm:$0xff]
    %v119 = vld [vmem:[#allocation2 + $0x188] sm:$0xff]
    %v120 = vld [vmem:[#allocation2 + $0x190] sm:$0xff]
    %v121 = vld [vmem:[#allocation2 + $0x198] sm:$0xff]
    %v122 = vld [vmem:[#allocation2 + $0x1a0] sm:$0xff]
    %v123 = vld [vmem:[#allocation2 + $0x1a8] sm:$0xff]
    %v124 = vld [vmem:[#allocation2 + $0x1b0] sm:$0xff]
    %v125 = vld [vmem:[#allocation2 + $0x1b8] sm:$0xff]
    %v126 = vld [vmem:[#allocation2 + $0x1c0] sm:$0xff]
    %v127 = vld [vmem:[#allocation2 + $0x1c8] sm:$0xff]
    %v128 = vld [vmem:[#allocation2 + $0x1d0] sm:$0xff]
    %v129 = vld [vmem:[#allocation2 + $0x1d8] sm:$0xff]
    %v130 = vld [vmem:[#allocation2 + $0x1e0] sm:$0xff]
    %v131 = vld [vmem:[#allocation2 + $0x1e8] sm:$0xff]
    %v132 = vld [vmem:[#allocation2 + $0x1f0] sm:$0xff]
    %v133 = vld [vmem:[#allocation2 + $0x1f8] sm:$0xff]
    %v134 = vld [vmem:[#allocation2 + $0x200] sm:$0xff]
    %v135 = vld [vmem:[#allocation2 + $0x208] sm:$0xff]
    %v136 = vld [vmem:[#allocation2 + $0x210] sm:$0xff]
    %v137 = vld [vmem:[#allocation2 + $0x218] sm:$0xff]
    %v138 = vld [vmem:[#allocation2 + $0x220] sm:$0xff]
    %v139 = vld [vmem:[#allocation2 + $0x228] sm:$0xff]
    %v140 = vld [vmem:[#allocation2 + $0x230] sm:$0xff]
    %v141 = vld [vmem:[#allocation2 + $0x238] sm:$0xff]
    %v142 = vld [vmem:[#allocation2 + $0x240] sm:$0xff]
    %v143 = vld [vmem:[#allocation2 + $0x248] sm:$0xff]
    %v144 = vld [vmem:[#allocation2 + $0x250] sm:$0xff]
    %v145 = vld [vmem:[#allocation2 + $0x258] sm:$0xff]
    %v146 = vld [vmem:[#allocation2 + $0x260] sm:$0xff]
    %v147 = vld [vmem:[#allocation2 + $0x268] sm:$0xff]
    %v148 = vld [vmem:[#allocation2 + $0x270] sm:$0xff]
    %v149 = vld [vmem:[#allocation2 + $0x278] sm:$0xff]
    %v150 = vld [vmem:[#allocation2 + $0x280] sm:$0xff]
    %v151 = vld [vmem:[#allocation2 + $0x288] sm:$0xff]
    %v152 = vld [vmem:[#allocation2 + $0x290] sm:$0xff]
    %v153 = vld [vmem:[#allocation2 + $0x298] sm:$0xff]
    %v154 = vld [vmem:[#allocation2 + $0x2a0] sm:$0xff]
    %v155 = vld [vmem:[#allocation2 + $0x2a8] sm:$0xff]
    %v156 = vld [vmem:[#allocation2 + $0x2b0] sm:$0xff]
    %v157 = vld [vmem:[#allocation2 + $0x2b8] sm:$0xff]
    %v158 = vld [vmem:[#allocation2 + $0x2c0] sm:$0xff]
    %v159 = vld [vmem:[#allocation2 + $0x2c8] sm:$0xff]
    %v160 = vld [vmem:[#allocation2 + $0x2d0] sm:$0xff]
    %v161 = vld [vmem:[#allocation2 + $0x2d8] sm:$0xff]
    %v162 = vld [vmem:[#allocation2 + $0x2e0] sm:$0xff]
    %v163 = vld [vmem:[#allocation2 + $0x2e8] sm:$0xff]
    %v164 = vld [vmem:[#allocation2 + $0x2f0] sm:$0xff]
    %v165 = vld [vmem:[#allocation2 + $0x2f8] sm:$0xff]
    %v166 = vld [vmem:[#allocation2 + $0x300] sm:$0xff]
    %v167 = vld [vmem:[#allocation2 + $0x308] sm:$0xff]
    %v168 = vld [vmem:[#allocation2 + $0x310] sm:$0xff]
    %v169 = vld [vmem:[#allocation2 + $0x318] sm:$0xff]
    %v170 = vld [vmem:[#allocation2 + $0x320] sm:$0xff]
    %v171 = vld [vmem:[#allocation2 + $0x328] sm:$0xff]
    %v172 = vld [vmem:[#allocation2 + $0x330] sm:$0xff]
    %v173 = vld [vmem:[#allocation2 + $0x338] sm:$0xff]
    %v174 = vld [vmem:[#allocation2 + $0x340] sm:$0xff]
    %v175 = vld [vmem:[#allocation2 + $0x348] sm:$0xff]
    %v176 = vld [vmem:[#allocation2 + $0x350] sm:$0xff]
    %v177 = vld [vmem:[#allocation2 + $0x358] sm:$0xff]
    %v178 = vld [vmem:[#allocation2 + $0x360] sm:$0xff]
    %v179 = vld [vmem:[#allocation2 + $0x368] sm:$0xff]
    %v180 = vld [vmem:[#allocation2 + $0x370] sm:$0xff]
    %v181 = vld [vmem:[#allocation2 + $0x378] sm:$0xff]
    %v182 = vld [vmem:[#allocation2 + $0x380] sm:$0xff]
    %v183 = vld [vmem:[#allocation2 + $0x388] sm:$0xff]
    %v184 = vld [vmem:[#allocation2 + $0x390] sm:$0xff]
    %v185 = vld [vmem:[#allocation2 + $0x398] sm:$0xff]
    %v186 = vld [vmem:[#allocation2 + $0x3a0] sm:$0xff]
    %v187 = vld [vmem:[#allocation2 + $0x3a8] sm:$0xff]
    %v188 = vld [vmem:[#allocation2 + $0x3b0] sm:$0xff]
    %v189 = vld [vmem:[#allocation2 + $0x3b8] sm:$0xff]
    %v190 = vld [vmem:[#allocation2 + $0x3c0] sm:$0xff]
    %v191 = vld [vmem:[#allocation2 + $0x3c8] sm:$0xff]
    %v192 = vld [vmem:[#allocation2 + $0x3d0] sm:$0xff]
    %v193 = vld [vmem:[#allocation2 + $0x3d8] sm:$0xff]
    %v194 = vld [vmem:[#allocation2 + $0x3e0] sm:$0xff]
    %v195 = vld [vmem:[#allocation2 + $0x3e8] sm:$0xff]
    %v196 = vld [vmem:[#allocation2 + $0x3f0] sm:$0xff]
    %v197 = vld [vmem:[#allocation2 + $0x3f8] sm:$0xff]
    %v198 = vld [vmem:[#allocation2 + $0x400] sm:$0xff]
    %v199 = vld [vmem:[#allocation2 + $0x408] sm:$0xff]
    %v200 = vld [vmem:[#allocation2 + $0x410] sm:$0xff]
    %v201 = vld [vmem:[#allocation2 + $0x418] sm:$0xff]
    %v202 = vld [vmem:[#allocation2 + $0x420] sm:$0xff]
    %v203 = vld [vmem:[#allocation2 + $0x428] sm:$0xff]
    %v204 = vld [vmem:[#allocation2 + $0x430] sm:$0xff]
    %v205 = vld [vmem:[#allocation2 + $0x438] sm:$0xff]
    %v206 = vld [vmem:[#allocation2 + $0x440] sm:$0xff]
    %v207 = vld [vmem:[#allocation2 + $0x448] sm:$0xff]
    %v208 = vld [vmem:[#allocation2 + $0x450] sm:$0xff]
    %v209 = vld [vmem:[#allocation2 + $0x458] sm:$0xff]
    %v210 = vld [vmem:[#allocation2 + $0x460] sm:$0xff]
    %v211 = vld [vmem:[#allocation2 + $0x468] sm:$0xff]
    %v212 = vld [vmem:[#allocation2 + $0x470] sm:$0xff]
    %v213 = vld [vmem:[#allocation2 + $0x478] sm:$0xff]
    %v214 = vld [vmem:[#allocation2 + $0x480] sm:$0xff]
    %v215 = vld [vmem:[#allocation2 + $0x488] sm:$0xff]
    %v216 = vld [vmem:[#allocation2 + $0x490] sm:$0xff]
    %v217 = vld [vmem:[#allocation2 + $0x498] sm:$0xff]
    %v218 = vld [vmem:[#allocation2 + $0x4a0] sm:$0xff]
    %v219 = vld [vmem:[#allocation2 + $0x4a8] sm:$0xff]
    %v220 = vld [vmem:[#allocation2 + $0x4b0] sm:$0xff]
    %v221 = vld [vmem:[#allocation2 + $0x4b8] sm:$0xff]
    %v222 = vld [vmem:[#allocation2 + $0x4c0] sm:$0xff]
    %v223 = vld [vmem:[#allocation2 + $0x4c8] sm:$0xff]
    %v224 = vld [vmem:[#allocation2 + $0x4d0] sm:$0xff]
    %v225 = vld [vmem:[#allocation2 + $0x4d8] sm:$0xff]
    %v226 = vld [vmem:[#allocation2 + $0x4e0] sm:$0xff]
    %v227 = vld [vmem:[#allocation2 + $0x4e8] sm:$0xff]
    %v228 = vld [vmem:[#allocation2 + $0x4f0] sm:$0xff]
    %v229 = vld [vmem:[#allocation2 + $0x4f8] sm:$0xff]
    %v230 = vld [vmem:[#allocation2 + $0x500] sm:$0xff]
    %v231 = vld [vmem:[#allocation2 + $0x508] sm:$0xff]
    %v232 = vld [vmem:[#allocation2 + $0x510] sm:$0xff]
    %v233 = vld [vmem:[#allocation2 + $0x518] sm:$0xff]
    %v234 = vld [vmem:[#allocation2 + $0x520] sm:$0xff]
    %v235 = vld [vmem:[#allocation2 + $0x528] sm:$0xff]
    %v236 = vld [vmem:[#allocation2 + $0x530] sm:$0xff]
    %v237 = vld [vmem:[#allocation2 + $0x538] sm:$0xff]
    %v238 = vld [vmem:[#allocation2 + $0x540] sm:$0xff]
    %v239 = vld [vmem:[#allocation2 + $0x548] sm:$0xff]
    %v240 = vld [vmem:[#allocation2 + $0x550] sm:$0xff]
    %v241 = vld [vmem:[#allocation2 + $0x558] sm:$0xff]
    %v242 = vld [vmem:[#allocation2 + $0x560] sm:$0xff]
    %v243 = vld [vmem:[#allocation2 + $0x568] sm:$0xff]
    %v244 = vld [vmem:[#allocation2 + $0x570] sm:$0xff]
    %v245 = vld [vmem:[#allocation2 + $0x578] sm:$0xff]
    %v246 = vld [vmem:[#allocation2 + $0x580] sm:$0xff]
    %v247 = vld [vmem:[#allocation2 + $0x588] sm:$0xff]
    %v248 = vld [vmem:[#allocation2 + $0x590] sm:$0xff]
    %v249 = vld [vmem:[#allocation2 + $0x598] sm:$0xff]
    %v250 = vld [vmem:[#allocation2 + $0x5a0] sm:$0xff]
    %v251 = vld [vmem:[#allocation2 + $0x5a8] sm:$0xff]
    %v252 = vld [vmem:[#allocation2 + $0x5b0] sm:$0xff]
    %v253 = vld [vmem:[#allocation2 + $0x5b8] sm:$0xff]
    %v254 = vld [vmem:[#allocation2 + $0x5c0] sm:$0xff]
    %v255 = vld [vmem:[#allocation2 + $0x5c8] sm:$0xff]
    %v256 = vld [vmem:[#allocation2 + $0x5d0] sm:$0xff]
    %v257 = vld [vmem:[#allocation2 + $0x5d8] sm:$0xff]
    %v258 = vld [vmem:[#allocation2 + $0x5e0] sm:$0xff]
    %v259 = vld [vmem:[#allocation2 + $0x5e8] sm:$0xff]
    %v260 = vld [vmem:[#allocation2 + $0x5f0] sm:$0xff]
    %v261 = vld [vmem:[#allocation2 + $0x5f8] sm:$0xff]
    %v262 = vld [vmem:[#allocation2 + $0x600] sm:$0xff]
    %v263 = vld [vmem:[#allocation2 + $0x608] sm:$0xff]
    %v264 = vld [vmem:[#allocation2 + $0x610] sm:$0xff]
    %v265 = vld [vmem:[#allocation2 + $0x618] sm:$0xff]
    %v266 = vld [vmem:[#allocation2 + $0x620] sm:$0xff]
    %v267 = vld [vmem:[#allocation2 + $0x628] sm:$0xff]
    %v268 = vld [vmem:[#allocation2 + $0x630] sm:$0xff]
    %v269 = vld [vmem:[#allocation2 + $0x638] sm:$0xff]
    %v270 = vld [vmem:[#allocation2 + $0x640] sm:$0xff]
    %v271 = vld [vmem:[#allocation2 + $0x648] sm:$0xff]
    %v272 = vld [vmem:[#allocation2 + $0x650] sm:$0xff]
    %v273 = vld [vmem:[#allocation2 + $0x658] sm:$0xff]
    %v274 = vld [vmem:[#allocation2 + $0x660] sm:$0xff]
    %v275 = vld [vmem:[#allocation2 + $0x668] sm:$0xff]
    %v276 = vld [vmem:[#allocation2 + $0x670] sm:$0xff]
    %v277 = vld [vmem:[#allocation2 + $0x678] sm:$0xff]
    %v278 = vld [vmem:[#allocation2 + $0x680] sm:$0xff]
    %v279 = vld [vmem:[#allocation2 + $0x688] sm:$0xff]
    %v280 = vld [vmem:[#allocation2 + $0x690] sm:$0xff]
    %v281 = vld [vmem:[#allocation2 + $0x698] sm:$0xff]
    %v282 = vld [vmem:[#allocation2 + $0x6a0] sm:$0xff]
    %v283 = vld [vmem:[#allocation2 + $0x6a8] sm:$0xff]
    %v284 = vld [vmem:[#allocation2 + $0x6b0] sm:$0xff]
    %v285 = vld [vmem:[#allocation2 + $0x6b8] sm:$0xff]
    %v286 = vld [vmem:[#allocation2 + $0x6c0] sm:$0xff]
    %v287 = vld [vmem:[#allocation2 + $0x6c8] sm:$0xff]
    %v288 = vld [vmem:[#allocation2 + $0x6d0] sm:$0xff]
    %v289 = vld [vmem:[#allocation2 + $0x6d8] sm:$0xff]
    %v290 = vld [vmem:[#allocation2 + $0x6e0] sm:$0xff]
    %v291 = vld [vmem:[#allocation2 + $0x6e8] sm:$0xff]
    %v292 = vld [vmem:[#allocation2 + $0x6f0] sm:$0xff]
    %v293 = vld [vmem:[#allocation2 + $0x6f8] sm:$0xff]
    %v294 = vld [vmem:[#allocation2 + $0x700] sm:$0xff]
    %v295 = vld [vmem:[#allocation2 + $0x708] sm:$0xff]
    %v296 = vld [vmem:[#allocation2 + $0x710] sm:$0xff]
    %v297 = vld [vmem:[#allocation2 + $0x718] sm:$0xff]
    %v298 = vld [vmem:[#allocation2 + $0x720] sm:$0xff]
    %v299 = vld [vmem:[#allocation2 + $0x728] sm:$0xff]
    %v300 = vld [vmem:[#allocation2 + $0x730] sm:$0xff]
    %v301 = vld [vmem:[#allocation2 + $0x738] sm:$0xff]
    %v302 = vld [vmem:[#allocation2 + $0x740] sm:$0xff]
    %v303 = vld [vmem:[#allocation2 + $0x748] sm:$0xff]
    %v304 = vld [vmem:[#allocation2 + $0x750] sm:$0xff]
    %v305 = vld [vmem:[#allocation2 + $0x758] sm:$0xff]
    %v306 = vld [vmem:[#allocation2 + $0x760] sm:$0xff]
    %v307 = vld [vmem:[#allocation2 + $0x768] sm:$0xff]
    %v308 = vld [vmem:[#allocation2 + $0x770] sm:$0xff]
    %v309 = vld [vmem:[#allocation2 + $0x778] sm:$0xff]
    %v310 = vld [vmem:[#allocation2 + $0x780] sm:$0xff]
    %v311 = vld [vmem:[#allocation2 + $0x788] sm:$0xff]
    %v312 = vld [vmem:[#allocation2 + $0x790] sm:$0xff]
    %v313 = vld [vmem:[#allocation2 + $0x798] sm:$0xff]
    %v314 = vld [vmem:[#allocation2 + $0x7a0] sm:$0xff]
    %v315 = vld [vmem:[#allocation2 + $0x7a8] sm:$0xff]
    %v316 = vld [vmem:[#allocation2 + $0x7b0] sm:$0xff]
    %v317 = vld [vmem:[#allocation2 + $0x7b8] sm:$0xff]
    %v318 = vld [vmem:[#allocation2 + $0x7c0] sm:$0xff]
    %v319 = vld [vmem:[#allocation2 + $0x7c8] sm:$0xff]
    %v320 = vld [vmem:[#allocation2 + $0x7d0] sm:$0xff]
    %v321 = vld [vmem:[#allocation2 + $0x7d8] sm:$0xff]
    %v322 = vld [vmem:[#allocation2 + $0x7e0] sm:$0xff]
    %v323 = vld [vmem:[#allocation2 + $0x7e8] sm:$0xff]
    %v324 = vld [vmem:[#allocation2 + $0x7f0] sm:$0xff]
    %v325 = vld [vmem:[#allocation2 + $0x7f8] sm:$0xff]
    %v326 = vld [vmem:[%s6] ss:$8 sm:$0xf]
    %v328 = vperm.slane %v326, 0
    %v329 = vperm.slane %v326, 1
    %v330 = vperm.slane %v326, 2
    %v331 = vperm.slane %v326, 3
    %337 = vst [vmem:[#allocation1] ss:$9 sm:$0xff] %v69
    %v338 = vld [vmem:[#allocation1] sm:$0xff]
    %v339 = vld [vmem:[#allocation1 + $0x9] sm:$0xff]
    %v340 = vld [vmem:[#allocation1 + $0x12] sm:$0xff]
    %v341 = vld [vmem:[#allocation1 + $0x1b] sm:$0xff]
    %v342 = vld [vmem:[#allocation1 + $0x24] sm:$0xff]
    %v343 = vld [vmem:[#allocation1 + $0x2d] sm:$0xff]
    %v344 = vld [vmem:[#allocation1 + $0x36] sm:$0xff]
    %v345 = vld [vmem:[#allocation1 + $0x3f] sm:$0xff]
    %v610 = vunpack.c.l.b16 %v70
    %v611 = vunpack.c.h.b16 %v70
    %v612 = vunpack.c.l.b16 %v71
    %v613 = vunpack.c.h.b16 %v71
    %v614 = vunpack.c.l.b16 %v72
    %v615 = vunpack.c.h.b16 %v72
    %v616 = vunpack.c.l.b16 %v73
    %v617 = vunpack.c.h.b16 %v73
    %v618 = vunpack.c.l.b16 %v74
    %v619 = vunpack.c.h.b16 %v74
    %v620 = vunpack.c.l.b16 %v75
    %v621 = vunpack.c.h.b16 %v75
    %v622 = vunpack.c.l.b16 %v76
    %v623 = vunpack.c.h.b16 %v76
    %v624 = vunpack.c.l.b16 %v77
    %v625 = vunpack.c.h.b16 %v77
    %v626 = vunpack.c.l.b16 %v78
    %v627 = vunpack.c.h.b16 %v78
    %v628 = vunpack.c.l.b16 %v79
    %v629 = vunpack.c.h.b16 %v79
    %v630 = vunpack.c.l.b16 %v80
    %v631 = vunpack.c.h.b16 %v80
    %v632 = vunpack.c.l.b16 %v81
    %v633 = vunpack.c.h.b16 %v81
    %v634 = vunpack.c.l.b16 %v82
    %v635 = vunpack.c.h.b16 %v82
    %v636 = vunpack.c.l.b16 %v83
    %v637 = vunpack.c.h.b16 %v83
    %v638 = vunpack.c.l.b16 %v84
    %v639 = vunpack.c.h.b16 %v84
    %v640 = vunpack.c.l.b16 %v85
    %v641 = vunpack.c.h.b16 %v85
    %v642 = vunpack.c.l.b16 %v86
    %v643 = vunpack.c.h.b16 %v86
    %v644 = vunpack.c.l.b16 %v87
    %v645 = vunpack.c.h.b16 %v87
    %v646 = vunpack.c.l.b16 %v88
    %v647 = vunpack.c.h.b16 %v88
    %v648 = vunpack.c.l.b16 %v89
    %v649 = vunpack.c.h.b16 %v89
    %v650 = vunpack.c.l.b16 %v90
    %v651 = vunpack.c.h.b16 %v90
    %v652 = vunpack.c.l.b16 %v91
    %v653 = vunpack.c.h.b16 %v91
    %v654 = vunpack.c.l.b16 %v92
    %v655 = vunpack.c.h.b16 %v92
    %v656 = vunpack.c.l.b16 %v93
    %v657 = vunpack.c.h.b16 %v93
    %v658 = vunpack.c.l.b16 %v94
    %v659 = vunpack.c.h.b16 %v94
    %v660 = vunpack.c.l.b16 %v95
    %v661 = vunpack.c.h.b16 %v95
    %v662 = vunpack.c.l.b16 %v96
    %v663 = vunpack.c.h.b16 %v96
    %v664 = vunpack.c.l.b16 %v97
    %v665 = vunpack.c.h.b16 %v97
    %v666 = vunpack.c.l.b16 %v98
    %v667 = vunpack.c.h.b16 %v98
    %v668 = vunpack.c.l.b16 %v99
    %v669 = vunpack.c.h.b16 %v99
    %v670 = vunpack.c.l.b16 %v100
    %v671 = vunpack.c.h.b16 %v100
    %v672 = vunpack.c.l.b16 %v101
    %v673 = vunpack.c.h.b16 %v101
    %v674 = vunpack.c.l.b16 %v102
    %v675 = vunpack.c.h.b16 %v102
    %v676 = vunpack.c.l.b16 %v103
    %v677 = vunpack.c.h.b16 %v103
    %v678 = vunpack.c.l.b16 %v104
    %v679 = vunpack.c.h.b16 %v104
    %v680 = vunpack.c.l.b16 %v105
    %v681 = vunpack.c.h.b16 %v105
    %v682 = vunpack.c.l.b16 %v106
    %v683 = vunpack.c.h.b16 %v106
    %v684 = vunpack.c.l.b16 %v107
    %v685 = vunpack.c.h.b16 %v107
    %v686 = vunpack.c.l.b16 %v108
    %v687 = vunpack.c.h.b16 %v108
    %v688 = vunpack.c.l.b16 %v109
    %v689 = vunpack.c.h.b16 %v109
    %v690 = vunpack.c.l.b16 %v110
    %v691 = vunpack.c.h.b16 %v110
    %v692 = vunpack.c.l.b16 %v111
    %v693 = vunpack.c.h.b16 %v111
    %v694 = vunpack.c.l.b16 %v112
    %v695 = vunpack.c.h.b16 %v112
    %v696 = vunpack.c.l.b16 %v113
    %v697 = vunpack.c.h.b16 %v113
    %v698 = vunpack.c.l.b16 %v114
    %v699 = vunpack.c.h.b16 %v114
    %v700 = vunpack.c.l.b16 %v115
    %v701 = vunpack.c.h.b16 %v115
    %v702 = vunpack.c.l.b16 %v116
    %v703 = vunpack.c.h.b16 %v116
    %v704 = vunpack.c.l.b16 %v117
    %v705 = vunpack.c.h.b16 %v117
    %v706 = vunpack.c.l.b16 %v118
    %v707 = vunpack.c.h.b16 %v118
    %v708 = vunpack.c.l.b16 %v119
    %v709 = vunpack.c.h.b16 %v119
    %v710 = vunpack.c.l.b16 %v120
    %v711 = vunpack.c.h.b16 %v120
    %v712 = vunpack.c.l.b16 %v121
    %v713 = vunpack.c.h.b16 %v121
    %v714 = vunpack.c.l.b16 %v122
    %v715 = vunpack.c.h.b16 %v122
    %v716 = vunpack.c.l.b16 %v123
    %v717 = vunpack.c.h.b16 %v123
    %v718 = vunpack.c.l.b16 %v124
    %v719 = vunpack.c.h.b16 %v124
    %v720 = vunpack.c.l.b16 %v125
    %v721 = vunpack.c.h.b16 %v125
    %v722 = vunpack.c.l.b16 %v126
    %v723 = vunpack.c.h.b16 %v126
    %v724 = vunpack.c.l.b16 %v127
    %v725 = vunpack.c.h.b16 %v127
    %v726 = vunpack.c.l.b16 %v128
    %v727 = vunpack.c.h.b16 %v128
    %v728 = vunpack.c.l.b16 %v129
    %v729 = vunpack.c.h.b16 %v129
    %v730 = vunpack.c.l.b16 %v130
    %v731 = vunpack.c.h.b16 %v130
    %v732 = vunpack.c.l.b16 %v131
    %v733 = vunpack.c.h.b16 %v131
    %v734 = vunpack.c.l.b16 %v132
    %v735 = vunpack.c.h.b16 %v132
    %v736 = vunpack.c.l.b16 %v133
    %v737 = vunpack.c.h.b16 %v133
    %v738 = vunpack.c.l.b16 %v134
    %v739 = vunpack.c.h.b16 %v134
    %v740 = vunpack.c.l.b16 %v135
    %v741 = vunpack.c.h.b16 %v135
    %v742 = vunpack.c.l.b16 %v136
    %v743 = vunpack.c.h.b16 %v136
    %v744 = vunpack.c.l.b16 %v137
    %v745 = vunpack.c.h.b16 %v137
    %v746 = vunpack.c.l.b16 %v138
    %v747 = vunpack.c.h.b16 %v138
    %v748 = vunpack.c.l.b16 %v139
    %v749 = vunpack.c.h.b16 %v139
    %v750 = vunpack.c.l.b16 %v140
    %v751 = vunpack.c.h.b16 %v140
    %v752 = vunpack.c.l.b16 %v141
    %v753 = vunpack.c.h.b16 %v141
    %v754 = vunpack.c.l.b16 %v142
    %v755 = vunpack.c.h.b16 %v142
    %v756 = vunpack.c.l.b16 %v143
    %v757 = vunpack.c.h.b16 %v143
    %v758 = vunpack.c.l.b16 %v144
    %v759 = vunpack.c.h.b16 %v144
    %v760 = vunpack.c.l.b16 %v145
    %v761 = vunpack.c.h.b16 %v145
    %v762 = vunpack.c.l.b16 %v146
    %v763 = vunpack.c.h.b16 %v146
    %v764 = vunpack.c.l.b16 %v147
    %v765 = vunpack.c.h.b16 %v147
    %v766 = vunpack.c.l.b16 %v148
    %v767 = vunpack.c.h.b16 %v148
    %v768 = vunpack.c.l.b16 %v149
    %v769 = vunpack.c.h.b16 %v149
    %v770 = vunpack.c.l.b16 %v150
    %v771 = vunpack.c.h.b16 %v150
    %v772 = vunpack.c.l.b16 %v151
    %v773 = vunpack.c.h.b16 %v151
    %v774 = vunpack.c.l.b16 %v152
    %v775 = vunpack.c.h.b16 %v152
    %v776 = vunpack.c.l.b16 %v153
    %v777 = vunpack.c.h.b16 %v153
    %v778 = vunpack.c.l.b16 %v154
    %v779 = vunpack.c.h.b16 %v154
    %v780 = vunpack.c.l.b16 %v155
    %v781 = vunpack.c.h.b16 %v155
    %v782 = vunpack.c.l.b16 %v156
    %v783 = vunpack.c.h.b16 %v156
    %v784 = vunpack.c.l.b16 %v157
    %v785 = vunpack.c.h.b16 %v157
    %v786 = vunpack.c.l.b16 %v158
    %v787 = vunpack.c.h.b16 %v158
    %v788 = vunpack.c.l.b16 %v159
    %v789 = vunpack.c.h.b16 %v159
    %v790 = vunpack.c.l.b16 %v160
    %v791 = vunpack.c.h.b16 %v160
    %v792 = vunpack.c.l.b16 %v161
    %v793 = vunpack.c.h.b16 %v161
    %v794 = vunpack.c.l.b16 %v162
    %v795 = vunpack.c.h.b16 %v162
    %v796 = vunpack.c.l.b16 %v163
    %v797 = vunpack.c.h.b16 %v163
    %v798 = vunpack.c.l.b16 %v164
    %v799 = vunpack.c.h.b16 %v164
    %v800 = vunpack.c.l.b16 %v165
    %v801 = vunpack.c.h.b16 %v165
    %v802 = vunpack.c.l.b16 %v166
    %v803 = vunpack.c.h.b16 %v166
    %v804 = vunpack.c.l.b16 %v167
    %v805 = vunpack.c.h.b16 %v167
    %v806 = vunpack.c.l.b16 %v168
    %v807 = vunpack.c.h.b16 %v168
    %v808 = vunpack.c.l.b16 %v169
    %v809 = vunpack.c.h.b16 %v169
    %v810 = vunpack.c.l.b16 %v170
    %v811 = vunpack.c.h.b16 %v170
    %v812 = vunpack.c.l.b16 %v171
    %v813 = vunpack.c.h.b16 %v171
    %v814 = vunpack.c.l.b16 %v172
    %v815 = vunpack.c.h.b16 %v172
    %v816 = vunpack.c.l.b16 %v173
    %v817 = vunpack.c.h.b16 %v173
    %v818 = vunpack.c.l.b16 %v174
    %v819 = vunpack.c.h.b16 %v174
    %v820 = vunpack.c.l.b16 %v175
    %v821 = vunpack.c.h.b16 %v175
    %v822 = vunpack.c.l.b16 %v176
    %v823 = vunpack.c.h.b16 %v176
    %v824 = vunpack.c.l.b16 %v177
    %v825 = vunpack.c.h.b16 %v177
    %v826 = vunpack.c.l.b16 %v178
    %v827 = vunpack.c.h.b16 %v178
    %v828 = vunpack.c.l.b16 %v179
    %v829 = vunpack.c.h.b16 %v179
    %v830 = vunpack.c.l.b16 %v180
    %v831 = vunpack.c.h.b16 %v180
    %v832 = vunpack.c.l.b16 %v181
    %v833 = vunpack.c.h.b16 %v181
    %v834 = vunpack.c.l.b16 %v182
    %v835 = vunpack.c.h.b16 %v182
    %v836 = vunpack.c.l.b16 %v183
    %v837 = vunpack.c.h.b16 %v183
    %v838 = vunpack.c.l.b16 %v184
    %v839 = vunpack.c.h.b16 %v184
    %v840 = vunpack.c.l.b16 %v185
    %v841 = vunpack.c.h.b16 %v185
    %v842 = vunpack.c.l.b16 %v186
    %v843 = vunpack.c.h.b16 %v186
    %v844 = vunpack.c.l.b16 %v187
    %v845 = vunpack.c.h.b16 %v187
    %v846 = vunpack.c.l.b16 %v188
    %v847 = vunpack.c.h.b16 %v188
    %v848 = vunpack.c.l.b16 %v189
    %v849 = vunpack.c.h.b16 %v189
    %v850 = vunpack.c.l.b16 %v190
    %v851 = vunpack.c.h.b16 %v190
    %v852 = vunpack.c.l.b16 %v191
    %v853 = vunpack.c.h.b16 %v191
    %v854 = vunpack.c.l.b16 %v192
    %v855 = vunpack.c.h.b16 %v192
    %v856 = vunpack.c.l.b16 %v193
    %v857 = vunpack.c.h.b16 %v193
    %v858 = vunpack.c.l.b16 %v194
    %v859 = vunpack.c.h.b16 %v194
    %v860 = vunpack.c.l.b16 %v195
    %v861 = vunpack.c.h.b16 %v195
    %v862 = vunpack.c.l.b16 %v196
    %v863 = vunpack.c.h.b16 %v196
    %v864 = vunpack.c.l.b16 %v197
    %v865 = vunpack.c.h.b16 %v197
    %v866 = vunpack.c.l.b16 %v198
    %v867 = vunpack.c.h.b16 %v198
    %v868 = vunpack.c.l.b16 %v199
    %v869 = vunpack.c.h.b16 %v199
    %v870 = vunpack.c.l.b16 %v200
    %v871 = vunpack.c.h.b16 %v200
    %v872 = vunpack.c.l.b16 %v201
    %v873 = vunpack.c.h.b16 %v201
    %v874 = vunpack.c.l.b16 %v202
    %v875 = vunpack.c.h.b16 %v202
    %v876 = vunpack.c.l.b16 %v203
    %v877 = vunpack.c.h.b16 %v203
    %v878 = vunpack.c.l.b16 %v204
    %v879 = vunpack.c.h.b16 %v204
    %v880 = vunpack.c.l.b16 %v205
    %v881 = vunpack.c.h.b16 %v205
    %v882 = vunpack.c.l.b16 %v206
    %v883 = vunpack.c.h.b16 %v206
    %v884 = vunpack.c.l.b16 %v207
    %v885 = vunpack.c.h.b16 %v207
    %v886 = vunpack.c.l.b16 %v208
    %v887 = vunpack.c.h.b16 %v208
    %v888 = vunpack.c.l.b16 %v209
    %v889 = vunpack.c.h.b16 %v209
    %v890 = vunpack.c.l.b16 %v210
    %v891 = vunpack.c.h.b16 %v210
    %v892 = vunpack.c.l.b16 %v211
    %v893 = vunpack.c.h.b16 %v211
    %v894 = vunpack.c.l.b16 %v212
    %v895 = vunpack.c.h.b16 %v212
    %v896 = vunpack.c.l.b16 %v213
    %v897 = vunpack.c.h.b16 %v213
    %v898 = vunpack.c.l.b16 %v214
    %v899 = vunpack.c.h.b16 %v214
    %v900 = vunpack.c.l.b16 %v215
    %v901 = vunpack.c.h.b16 %v215
    %v902 = vunpack.c.l.b16 %v216
    %v903 = vunpack.c.h.b16 %v216
    %v904 = vunpack.c.l.b16 %v217
    %v905 = vunpack.c.h.b16 %v217
    %v906 = vunpack.c.l.b16 %v218
    %v907 = vunpack.c.h.b16 %v218
    %v908 = vunpack.c.l.b16 %v219
    %v909 = vunpack.c.h.b16 %v219
    %v910 = vunpack.c.l.b16 %v220
    %v911 = vunpack.c.h.b16 %v220
    %v912 = vunpack.c.l.b16 %v221
    %v913 = vunpack.c.h.b16 %v221
    %v914 = vunpack.c.l.b16 %v222
    %v915 = vunpack.c.h.b16 %v222
    %v916 = vunpack.c.l.b16 %v223
    %v917 = vunpack.c.h.b16 %v223
    %v918 = vunpack.c.l.b16 %v224
    %v919 = vunpack.c.h.b16 %v224
    %v920 = vunpack.c.l.b16 %v225
    %v921 = vunpack.c.h.b16 %v225
    %v922 = vunpack.c.l.b16 %v226
    %v923 = vunpack.c.h.b16 %v226
    %v924 = vunpack.c.l.b16 %v227
    %v925 = vunpack.c.h.b16 %v227
    %v926 = vunpack.c.l.b16 %v228
    %v927 = vunpack.c.h.b16 %v228
    %v928 = vunpack.c.l.b16 %v229
    %v929 = vunpack.c.h.b16 %v229
    %v930 = vunpack.c.l.b16 %v230
    %v931 = vunpack.c.h.b16 %v230
    %v932 = vunpack.c.l.b16 %v231
    %v933 = vunpack.c.h.b16 %v231
    %v934 = vunpack.c.l.b16 %v232
    %v935 = vunpack.c.h.b16 %v232
    %v936 = vunpack.c.l.b16 %v233
    %v937 = vunpack.c.h.b16 %v233
    %v938 = vunpack.c.l.b16 %v234
    %v939 = vunpack.c.h.b16 %v234
    %v940 = vunpack.c.l.b16 %v235
    %v941 = vunpack.c.h.b16 %v235
    %v942 = vunpack.c.l.b16 %v236
    %v943 = vunpack.c.h.b16 %v236
    %v944 = vunpack.c.l.b16 %v237
    %v945 = vunpack.c.h.b16 %v237
    %v946 = vunpack.c.l.b16 %v238
    %v947 = vunpack.c.h.b16 %v238
    %v948 = vunpack.c.l.b16 %v239
    %v949 = vunpack.c.h.b16 %v239
    %v950 = vunpack.c.l.b16 %v240
    %v951 = vunpack.c.h.b16 %v240
    %v952 = vunpack.c.l.b16 %v241
    %v953 = vunpack.c.h.b16 %v241
    %v954 = vunpack.c.l.b16 %v242
    %v955 = vunpack.c.h.b16 %v242
    %v956 = vunpack.c.l.b16 %v243
    %v957 = vunpack.c.h.b16 %v243
    %v958 = vunpack.c.l.b16 %v244
    %v959 = vunpack.c.h.b16 %v244
    %v960 = vunpack.c.l.b16 %v245
    %v961 = vunpack.c.h.b16 %v245
    %v962 = vunpack.c.l.b16 %v246
    %v963 = vunpack.c.h.b16 %v246
    %v964 = vunpack.c.l.b16 %v247
    %v965 = vunpack.c.h.b16 %v247
    %v966 = vunpack.c.l.b16 %v248
    %v967 = vunpack.c.h.b16 %v248
    %v968 = vunpack.c.l.b16 %v249
    %v969 = vunpack.c.h.b16 %v249
    %v970 = vunpack.c.l.b16 %v250
    %v971 = vunpack.c.h.b16 %v250
    %v972 = vunpack.c.l.b16 %v251
    %v973 = vunpack.c.h.b16 %v251
    %v974 = vunpack.c.l.b16 %v252
    %v975 = vunpack.c.h.b16 %v252
    %v976 = vunpack.c.l.b16 %v253
    %v977 = vunpack.c.h.b16 %v253
    %v978 = vunpack.c.l.b16 %v254
    %v979 = vunpack.c.h.b16 %v254
    %v980 = vunpack.c.l.b16 %v255
    %v981 = vunpack.c.h.b16 %v255
    %v982 = vunpack.c.l.b16 %v256
    %v983 = vunpack.c.h.b16 %v256
    %v984 = vunpack.c.l.b16 %v257
    %v985 = vunpack.c.h.b16 %v257
    %v986 = vunpack.c.l.b16 %v258
    %v987 = vunpack.c.h.b16 %v258
    %v988 = vunpack.c.l.b16 %v259
    %v989 = vunpack.c.h.b16 %v259
    %v990 = vunpack.c.l.b16 %v260
    %v991 = vunpack.c.h.b16 %v260
    %v992 = vunpack.c.l.b16 %v261
    %v993 = vunpack.c.h.b16 %v261
    %v994 = vunpack.c.l.b16 %v262
    %v995 = vunpack.c.h.b16 %v262
    %v996 = vunpack.c.l.b16 %v263
    %v997 = vunpack.c.h.b16 %v263
    %v998 = vunpack.c.l.b16 %v264
    %v999 = vunpack.c.h.b16 %v264
    %v1000 = vunpack.c.l.b16 %v265
    %v1001 = vunpack.c.h.b16 %v265
    %v1002 = vunpack.c.l.b16 %v266
    %v1003 = vunpack.c.h.b16 %v266
    %v1004 = vunpack.c.l.b16 %v267
    %v1005 = vunpack.c.h.b16 %v267
    %v1006 = vunpack.c.l.b16 %v268
    %v1007 = vunpack.c.h.b16 %v268
    %v1008 = vunpack.c.l.b16 %v269
    %v1009 = vunpack.c.h.b16 %v269
    %v1010 = vunpack.c.l.b16 %v270
    %v1011 = vunpack.c.h.b16 %v270
    %v1012 = vunpack.c.l.b16 %v271
    %v1013 = vunpack.c.h.b16 %v271
    %v1014 = vunpack.c.l.b16 %v272
    %v1015 = vunpack.c.h.b16 %v272
    %v1016 = vunpack.c.l.b16 %v273
    %v1017 = vunpack.c.h.b16 %v273
    %v1018 = vunpack.c.l.b16 %v274
    %v1019 = vunpack.c.h.b16 %v274
    %v1020 = vunpack.c.l.b16 %v275
    %v1021 = vunpack.c.h.b16 %v275
    %v1022 = vunpack.c.l.b16 %v276
    %v1023 = vunpack.c.h.b16 %v276
    %v1024 = vunpack.c.l.b16 %v277
    %v1025 = vunpack.c.h.b16 %v277
    %v1026 = vunpack.c.l.b16 %v278
    %v1027 = vunpack.c.h.b16 %v278
    %v1028 = vunpack.c.l.b16 %v279
    %v1029 = vunpack.c.h.b16 %v279
    %v1030 = vunpack.c.l.b16 %v280
    %v1031 = vunpack.c.h.b16 %v280
    %v1032 = vunpack.c.l.b16 %v281
    %v1033 = vunpack.c.h.b16 %v281
    %v1034 = vunpack.c.l.b16 %v282
    %v1035 = vunpack.c.h.b16 %v282
    %v1036 = vunpack.c.l.b16 %v283
    %v1037 = vunpack.c.h.b16 %v283
    %v1038 = vunpack.c.l.b16 %v284
    %v1039 = vunpack.c.h.b16 %v284
    %v1040 = vunpack.c.l.b16 %v285
    %v1041 = vunpack.c.h.b16 %v285
    %v1042 = vunpack.c.l.b16 %v286
    %v1043 = vunpack.c.h.b16 %v286
    %v1044 = vunpack.c.l.b16 %v287
    %v1045 = vunpack.c.h.b16 %v287
    %v1046 = vunpack.c.l.b16 %v288
    %v1047 = vunpack.c.h.b16 %v288
    %v1048 = vunpack.c.l.b16 %v289
    %v1049 = vunpack.c.h.b16 %v289
    %v1050 = vunpack.c.l.b16 %v290
    %v1051 = vunpack.c.h.b16 %v290
    %v1052 = vunpack.c.l.b16 %v291
    %v1053 = vunpack.c.h.b16 %v291
    %v1054 = vunpack.c.l.b16 %v292
    %v1055 = vunpack.c.h.b16 %v292
    %v1056 = vunpack.c.l.b16 %v293
    %v1057 = vunpack.c.h.b16 %v293
    %v1058 = vunpack.c.l.b16 %v294
    %v1059 = vunpack.c.h.b16 %v294
    %v1060 = vunpack.c.l.b16 %v295
    %v1061 = vunpack.c.h.b16 %v295
    %v1062 = vunpack.c.l.b16 %v296
    %v1063 = vunpack.c.h.b16 %v296
    %v1064 = vunpack.c.l.b16 %v297
    %v1065 = vunpack.c.h.b16 %v297
    %v1066 = vunpack.c.l.b16 %v298
    %v1067 = vunpack.c.h.b16 %v298
    %v1068 = vunpack.c.l.b16 %v299
    %v1069 = vunpack.c.h.b16 %v299
    %v1070 = vunpack.c.l.b16 %v300
    %v1071 = vunpack.c.h.b16 %v300
    %v1072 = vunpack.c.l.b16 %v301
    %v1073 = vunpack.c.h.b16 %v301
    %v1074 = vunpack.c.l.b16 %v302
    %v1075 = vunpack.c.h.b16 %v302
    %v1076 = vunpack.c.l.b16 %v303
    %v1077 = vunpack.c.h.b16 %v303
    %v1078 = vunpack.c.l.b16 %v304
    %v1079 = vunpack.c.h.b16 %v304
    %v1080 = vunpack.c.l.b16 %v305
    %v1081 = vunpack.c.h.b16 %v305
    %v1082 = vunpack.c.l.b16 %v306
    %v1083 = vunpack.c.h.b16 %v306
    %v1084 = vunpack.c.l.b16 %v307
    %v1085 = vunpack.c.h.b16 %v307
    %v1086 = vunpack.c.l.b16 %v308
    %v1087 = vunpack.c.h.b16 %v308
    %v1088 = vunpack.c.l.b16 %v309
    %v1089 = vunpack.c.h.b16 %v309
    %v1090 = vunpack.c.l.b16 %v310
    %v1091 = vunpack.c.h.b16 %v310
    %v1092 = vunpack.c.l.b16 %v311
    %v1093 = vunpack.c.h.b16 %v311
    %v1094 = vunpack.c.l.b16 %v312
    %v1095 = vunpack.c.h.b16 %v312
    %v1096 = vunpack.c.l.b16 %v313
    %v1097 = vunpack.c.h.b16 %v313
    %v1098 = vunpack.c.l.b16 %v314
    %v1099 = vunpack.c.h.b16 %v314
    %v1100 = vunpack.c.l.b16 %v315
    %v1101 = vunpack.c.h.b16 %v315
    %v1102 = vunpack.c.l.b16 %v316
    %v1103 = vunpack.c.h.b16 %v316
    %v1104 = vunpack.c.l.b16 %v317
    %v1105 = vunpack.c.h.b16 %v317
    %v1106 = vunpack.c.l.b16 %v318
    %v1107 = vunpack.c.h.b16 %v318
    %v1108 = vunpack.c.l.b16 %v319
    %v1109 = vunpack.c.h.b16 %v319
    %v1110 = vunpack.c.l.b16 %v320
    %v1111 = vunpack.c.h.b16 %v320
    %v1112 = vunpack.c.l.b16 %v321
    %v1113 = vunpack.c.h.b16 %v321
    %v1114 = vunpack.c.l.b16 %v322
    %v1115 = vunpack.c.h.b16 %v322
    %v1116 = vunpack.c.l.b16 %v323
    %v1117 = vunpack.c.h.b16 %v323
    %v1118 = vunpack.c.l.b16 %v324
    %v1119 = vunpack.c.h.b16 %v324
    %v1120 = vunpack.c.l.b16 %v325
    %v1121 = vunpack.c.h.b16 %v325
    %v1122 = vpack.c.b16 %v614, %v610
    %v1123 = vpack.c.b16 %v615, %v611
    %v1124 = vpack.c.b16 %v616, %v612
    %v1125 = vpack.c.b16 %v617, %v613
    %v1126 = vpack.c.b16 %v622, %v618
    %v1127 = vpack.c.b16 %v623, %v619
    %v1128 = vpack.c.b16 %v624, %v620
    %v1129 = vpack.c.b16 %v625, %v621
    %v1130 = vpack.c.b16 %v630, %v626
    %v1131 = vpack.c.b16 %v631, %v627
    %v1132 = vpack.c.b16 %v632, %v628
    %v1133 = vpack.c.b16 %v633, %v629
    %v1134 = vpack.c.b16 %v638, %v634
    %v1135 = vpack.c.b16 %v639, %v635
    %v1136 = vpack.c.b16 %v640, %v636
    %v1137 = vpack.c.b16 %v641, %v637
    %v1138 = vpack.c.b16 %v646, %v642
    %v1139 = vpack.c.b16 %v647, %v643
    %v1140 = vpack.c.b16 %v648, %v644
    %v1141 = vpack.c.b16 %v649, %v645
    %v1142 = vpack.c.b16 %v654, %v650
    %v1143 = vpack.c.b16 %v655, %v651
    %v1144 = vpack.c.b16 %v656, %v652
    %v1145 = vpack.c.b16 %v657, %v653
    %v1146 = vpack.c.b16 %v662, %v658
    %v1147 = vpack.c.b16 %v663, %v659
    %v1148 = vpack.c.b16 %v664, %v660
    %v1149 = vpack.c.b16 %v665, %v661
    %v1150 = vpack.c.b16 %v670, %v666
    %v1151 = vpack.c.b16 %v671, %v667
    %v1152 = vpack.c.b16 %v672, %v668
    %v1153 = vpack.c.b16 %v673, %v669
    %v1154 = vpack.c.b16 %v678, %v674
    %v1155 = vpack.c.b16 %v679, %v675
    %v1156 = vpack.c.b16 %v680, %v676
    %v1157 = vpack.c.b16 %v681, %v677
    %v1158 = vpack.c.b16 %v686, %v682
    %v1159 = vpack.c.b16 %v687, %v683
    %v1160 = vpack.c.b16 %v688, %v684
    %v1161 = vpack.c.b16 %v689, %v685
    %v1162 = vpack.c.b16 %v694, %v690
    %v1163 = vpack.c.b16 %v695, %v691
    %v1164 = vpack.c.b16 %v696, %v692
    %v1165 = vpack.c.b16 %v697, %v693
    %v1166 = vpack.c.b16 %v702, %v698
    %v1167 = vpack.c.b16 %v703, %v699
    %v1168 = vpack.c.b16 %v704, %v700
    %v1169 = vpack.c.b16 %v705, %v701
    %v1170 = vpack.c.b16 %v710, %v706
    %v1171 = vpack.c.b16 %v711, %v707
    %v1172 = vpack.c.b16 %v712, %v708
    %v1173 = vpack.c.b16 %v713, %v709
    %v1174 = vpack.c.b16 %v718, %v714
    %v1175 = vpack.c.b16 %v719, %v715
    %v1176 = vpack.c.b16 %v720, %v716
    %v1177 = vpack.c.b16 %v721, %v717
    %v1178 = vpack.c.b16 %v726, %v722
    %v1179 = vpack.c.b16 %v727, %v723
    %v1180 = vpack.c.b16 %v728, %v724
    %v1181 = vpack.c.b16 %v729, %v725
    %v1182 = vpack.c.b16 %v734, %v730
    %v1183 = vpack.c.b16 %v735, %v731
    %v1184 = vpack.c.b16 %v736, %v732
    %v1185 = vpack.c.b16 %v737, %v733
    %v1186 = vpack.c.b16 %v742, %v738
    %v1187 = vpack.c.b16 %v743, %v739
    %v1188 = vpack.c.b16 %v744, %v740
    %v1189 = vpack.c.b16 %v745, %v741
    %v1190 = vpack.c.b16 %v750, %v746
    %v1191 = vpack.c.b16 %v751, %v747
    %v1192 = vpack.c.b16 %v752, %v748
    %v1193 = vpack.c.b16 %v753, %v749
    %v1194 = vpack.c.b16 %v758, %v754
    %v1195 = vpack.c.b16 %v759, %v755
    %v1196 = vpack.c.b16 %v760, %v756
    %v1197 = vpack.c.b16 %v761, %v757
    %v1198 = vpack.c.b16 %v766, %v762
    %v1199 = vpack.c.b16 %v767, %v763
    %v1200 = vpack.c.b16 %v768, %v764
    %v1201 = vpack.c.b16 %v769, %v765
    %v1202 = vpack.c.b16 %v774, %v770
    %v1203 = vpack.c.b16 %v775, %v771
    %v1204 = vpack.c.b16 %v776, %v772
    %v1205 = vpack.c.b16 %v777, %v773
    %v1206 = vpack.c.b16 %v782, %v778
    %v1207 = vpack.c.b16 %v783, %v779
    %v1208 = vpack.c.b16 %v784, %v780
    %v1209 = vpack.c.b16 %v785, %v781
    %v1210 = vpack.c.b16 %v790, %v786
    %v1211 = vpack.c.b16 %v791, %v787
    %v1212 = vpack.c.b16 %v792, %v788
    %v1213 = vpack.c.b16 %v793, %v789
    %v1214 = vpack.c.b16 %v798, %v794
    %v1215 = vpack.c.b16 %v799, %v795
    %v1216 = vpack.c.b16 %v800, %v796
    %v1217 = vpack.c.b16 %v801, %v797
    %v1218 = vpack.c.b16 %v806, %v802
    %v1219 = vpack.c.b16 %v807, %v803
    %v1220 = vpack.c.b16 %v808, %v804
    %v1221 = vpack.c.b16 %v809, %v805
    %v1222 = vpack.c.b16 %v814, %v810
    %v1223 = vpack.c.b16 %v815, %v811
    %v1224 = vpack.c.b16 %v816, %v812
    %v1225 = vpack.c.b16 %v817, %v813
    %v1226 = vpack.c.b16 %v822, %v818
    %v1227 = vpack.c.b16 %v823, %v819
    %v1228 = vpack.c.b16 %v824, %v820
    %v1229 = vpack.c.b16 %v825, %v821
    %v1230 = vpack.c.b16 %v830, %v826
    %v1231 = vpack.c.b16 %v831, %v827
    %v1232 = vpack.c.b16 %v832, %v828
    %v1233 = vpack.c.b16 %v833, %v829
    %v1234 = vpack.c.b16 %v838, %v834
    %v1235 = vpack.c.b16 %v839, %v835
    %v1236 = vpack.c.b16 %v840, %v836
    %v1237 = vpack.c.b16 %v841, %v837
    %v1238 = vpack.c.b16 %v846, %v842
    %v1239 = vpack.c.b16 %v847, %v843
    %v1240 = vpack.c.b16 %v848, %v844
    %v1241 = vpack.c.b16 %v849, %v845
    %v1242 = vpack.c.b16 %v854, %v850
    %v1243 = vpack.c.b16 %v855, %v851
    %v1244 = vpack.c.b16 %v856, %v852
    %v1245 = vpack.c.b16 %v857, %v853
    %v1246 = vpack.c.b16 %v862, %v858
    %v1247 = vpack.c.b16 %v863, %v859
    %v1248 = vpack.c.b16 %v864, %v860
    %v1249 = vpack.c.b16 %v865, %v861
    %v1250 = vpack.c.b16 %v870, %v866
    %v1251 = vpack.c.b16 %v871, %v867
    %v1252 = vpack.c.b16 %v872, %v868
    %v1253 = vpack.c.b16 %v873, %v869
    %v1254 = vpack.c.b16 %v878, %v874
    %v1255 = vpack.c.b16 %v879, %v875
    %v1256 = vpack.c.b16 %v880, %v876
    %v1257 = vpack.c.b16 %v881, %v877
    %v1258 = vpack.c.b16 %v886, %v882
    %v1259 = vpack.c.b16 %v887, %v883
    %v1260 = vpack.c.b16 %v888, %v884
    %v1261 = vpack.c.b16 %v889, %v885
    %v1262 = vpack.c.b16 %v894, %v890
    %v1263 = vpack.c.b16 %v895, %v891
    %v1264 = vpack.c.b16 %v896, %v892
    %v1265 = vpack.c.b16 %v897, %v893
    %v1266 = vpack.c.b16 %v902, %v898
    %v1267 = vpack.c.b16 %v903, %v899
    %v1268 = vpack.c.b16 %v904, %v900
    %v1269 = vpack.c.b16 %v905, %v901
    %v1270 = vpack.c.b16 %v910, %v906
    %v1271 = vpack.c.b16 %v911, %v907
    %v1272 = vpack.c.b16 %v912, %v908
    %v1273 = vpack.c.b16 %v913, %v909
    %v1274 = vpack.c.b16 %v918, %v914
    %v1275 = vpack.c.b16 %v919, %v915
    %v1276 = vpack.c.b16 %v920, %v916
    %v1277 = vpack.c.b16 %v921, %v917
    %v1278 = vpack.c.b16 %v926, %v922
    %v1279 = vpack.c.b16 %v927, %v923
    %v1280 = vpack.c.b16 %v928, %v924
    %v1281 = vpack.c.b16 %v929, %v925
    %v1282 = vpack.c.b16 %v934, %v930
    %v1283 = vpack.c.b16 %v935, %v931
    %v1284 = vpack.c.b16 %v936, %v932
    %v1285 = vpack.c.b16 %v937, %v933
    %v1286 = vpack.c.b16 %v942, %v938
    %v1287 = vpack.c.b16 %v943, %v939
    %v1288 = vpack.c.b16 %v944, %v940
    %v1289 = vpack.c.b16 %v945, %v941
    %v1290 = vpack.c.b16 %v950, %v946
    %v1291 = vpack.c.b16 %v951, %v947
    %v1292 = vpack.c.b16 %v952, %v948
    %v1293 = vpack.c.b16 %v953, %v949
    %v1294 = vpack.c.b16 %v958, %v954
    %v1295 = vpack.c.b16 %v959, %v955
    %v1296 = vpack.c.b16 %v960, %v956
    %v1297 = vpack.c.b16 %v961, %v957
    %v1298 = vpack.c.b16 %v966, %v962
    %v1299 = vpack.c.b16 %v967, %v963
    %v1300 = vpack.c.b16 %v968, %v964
    %v1301 = vpack.c.b16 %v969, %v965
    %v1302 = vpack.c.b16 %v974, %v970
    %v1303 = vpack.c.b16 %v975, %v971
    %v1304 = vpack.c.b16 %v976, %v972
    %v1305 = vpack.c.b16 %v977, %v973
    %v1306 = vpack.c.b16 %v982, %v978
    %v1307 = vpack.c.b16 %v983, %v979
    %v1308 = vpack.c.b16 %v984, %v980
    %v1309 = vpack.c.b16 %v985, %v981
    %v1310 = vpack.c.b16 %v990, %v986
    %v1311 = vpack.c.b16 %v991, %v987
    %v1312 = vpack.c.b16 %v992, %v988
    %v1313 = vpack.c.b16 %v993, %v989
    %v1314 = vpack.c.b16 %v998, %v994
    %v1315 = vpack.c.b16 %v999, %v995
    %v1316 = vpack.c.b16 %v1000, %v996
    %v1317 = vpack.c.b16 %v1001, %v997
    %v1318 = vpack.c.b16 %v1006, %v1002
    %v1319 = vpack.c.b16 %v1007, %v1003
    %v1320 = vpack.c.b16 %v1008, %v1004
    %v1321 = vpack.c.b16 %v1009, %v1005
    %v1322 = vpack.c.b16 %v1014, %v1010
    %v1323 = vpack.c.b16 %v1015, %v1011
    %v1324 = vpack.c.b16 %v1016, %v1012
    %v1325 = vpack.c.b16 %v1017, %v1013
    %v1326 = vpack.c.b16 %v1022, %v1018
    %v1327 = vpack.c.b16 %v1023, %v1019
    %v1328 = vpack.c.b16 %v1024, %v1020
    %v1329 = vpack.c.b16 %v1025, %v1021
    %v1330 = vpack.c.b16 %v1030, %v1026
    %v1331 = vpack.c.b16 %v1031, %v1027
    %v1332 = vpack.c.b16 %v1032, %v1028
    %v1333 = vpack.c.b16 %v1033, %v1029
    %v1334 = vpack.c.b16 %v1038, %v1034
    %v1335 = vpack.c.b16 %v1039, %v1035
    %v1336 = vpack.c.b16 %v1040, %v1036
    %v1337 = vpack.c.b16 %v1041, %v1037
    %v1338 = vpack.c.b16 %v1046, %v1042
    %v1339 = vpack.c.b16 %v1047, %v1043
    %v1340 = vpack.c.b16 %v1048, %v1044
    %v1341 = vpack.c.b16 %v1049, %v1045
    %v1342 = vpack.c.b16 %v1054, %v1050
    %v1343 = vpack.c.b16 %v1055, %v1051
    %v1344 = vpack.c.b16 %v1056, %v1052
    %v1345 = vpack.c.b16 %v1057, %v1053
    %v1346 = vpack.c.b16 %v1062, %v1058
    %v1347 = vpack.c.b16 %v1063, %v1059
    %v1348 = vpack.c.b16 %v1064, %v1060
    %v1349 = vpack.c.b16 %v1065, %v1061
    %v1350 = vpack.c.b16 %v1070, %v1066
    %v1351 = vpack.c.b16 %v1071, %v1067
    %v1352 = vpack.c.b16 %v1072, %v1068
    %v1353 = vpack.c.b16 %v1073, %v1069
    %v1354 = vpack.c.b16 %v1078, %v1074
    %v1355 = vpack.c.b16 %v1079, %v1075
    %v1356 = vpack.c.b16 %v1080, %v1076
    %v1357 = vpack.c.b16 %v1081, %v1077
    %v1358 = vpack.c.b16 %v1086, %v1082
    %v1359 = vpack.c.b16 %v1087, %v1083
    %v1360 = vpack.c.b16 %v1088, %v1084
    %v1361 = vpack.c.b16 %v1089, %v1085
    %v1362 = vpack.c.b16 %v1094, %v1090
    %v1363 = vpack.c.b16 %v1095, %v1091
    %v1364 = vpack.c.b16 %v1096, %v1092
    %v1365 = vpack.c.b16 %v1097, %v1093
    %v1366 = vpack.c.b16 %v1102, %v1098
    %v1367 = vpack.c.b16 %v1103, %v1099
    %v1368 = vpack.c.b16 %v1104, %v1100
    %v1369 = vpack.c.b16 %v1105, %v1101
    %v1370 = vpack.c.b16 %v1110, %v1106
    %v1371 = vpack.c.b16 %v1111, %v1107
    %v1372 = vpack.c.b16 %v1112, %v1108
    %v1373 = vpack.c.b16 %v1113, %v1109
    %v1374 = vpack.c.b16 %v1118, %v1114
    %v1375 = vpack.c.b16 %v1119, %v1115
    %v1376 = vpack.c.b16 %v1120, %v1116
    %v1377 = vpack.c.b16 %v1121, %v1117
    %1634 = vmatpush.bf16.msra.mxu0 %v1150
    %1635 = vmatpush.bf16.msra.mxu0 %v1146
    %1636 = vmatpush.bf16.msra.mxu0 %v1142
    %1637 = vmatpush.bf16.msra.mxu0 %v1138
    %1638 = vmatpush.bf16.msra.mxu0 %v1134
    %1639 = vmatpush.bf16.msra.mxu0 %v1130
    %1640 = vmatpush.bf16.msra.mxu0 %v1126
    %1641 = vmatpush.bf16.msra.mxu0 %v1122
    %1642 = vmatmul.bf16.gmra.mxu0 %v338
    %v1643 = vpop.f32.mrf.mxu0
    %v1644 = vadd.f32 %v328, %v1643
    %v1645 = vpop.f32.mrf.mxu0
    %1646 = vdwg.mxu0
    %1647 = vmatpush.bf16.msra.mxu0 %v1182
    %1648 = vmatpush.bf16.msra.mxu0 %v1178
    %1649 = vmatpush.bf16.msra.mxu0 %v1174
    %1650 = vmatpush.bf16.msra.mxu0 %v1170
    %1651 = vmatpush.bf16.msra.mxu0 %v1166
    %1652 = vmatpush.bf16.msra.mxu0 %v1162
    %1653 = vmatpush.bf16.msra.mxu0 %v1158
    %1654 = vmatpush.bf16.msra.mxu0 %v1154
    %1655 = vmatmul.bf16.gmra.mxu0 %v339
    %v1656 = vpop.f32.mrf.mxu0
    %v1657 = vadd.f32 %v1644, %v1656
    %v1658 = vpop.f32.mrf.mxu0
    %1659 = vdwg.mxu0
    %1660 = vmatpush.bf16.msra.mxu0 %v1214
    %1661 = vmatpush.bf16.msra.mxu0 %v1210
    %1662 = vmatpush.bf16.msra.mxu0 %v1206
    %1663 = vmatpush.bf16.msra.mxu0 %v1202
    %1664 = vmatpush.bf16.msra.mxu0 %v1198
    %1665 = vmatpush.bf16.msra.mxu0 %v1194
    %1666 = vmatpush.bf16.msra.mxu0 %v1190
    %1667 = vmatpush.bf16.msra.mxu0 %v1186
    %1668 = vmatmul.bf16.gmra.mxu0 %v340
    %v1669 = vpop.f32.mrf.mxu0
    %v1670 = vadd.f32 %v1657, %v1669
    %v1671 = vpop.f32.mrf.mxu0
    %1672 = vdwg.mxu0
    %1673 = vmatpush.bf16.msra.mxu0 %v1246
    %1674 = vmatpush.bf16.msra.mxu0 %v1242
    %1675 = vmatpush.bf16.msra.mxu0 %v1238
    %1676 = vmatpush.bf16.msra.mxu0 %v1234
    %1677 = vmatpush.bf16.msra.mxu0 %v1230
    %1678 = vmatpush.bf16.msra.mxu0 %v1226
    %1679 = vmatpush.bf16.msra.mxu0 %v1222
    %1680 = vmatpush.bf16.msra.mxu0 %v1218
    %1681 = vmatmul.bf16.gmra.mxu0 %v341
    %v1682 = vpop.f32.mrf.mxu0
    %v1683 = vadd.f32 %v1670, %v1682
    %v1684 = vpop.f32.mrf.mxu0
    %1685 = vdwg.mxu0
    %1686 = vmatpush.bf16.msra.mxu0 %v1278
    %1687 = vmatpush.bf16.msra.mxu0 %v1274
    %1688 = vmatpush.bf16.msra.mxu0 %v1270
    %1689 = vmatpush.bf16.msra.mxu0 %v1266
    %1690 = vmatpush.bf16.msra.mxu0 %v1262
    %1691 = vmatpush.bf16.msra.mxu0 %v1258
    %1692 = vmatpush.bf16.msra.mxu0 %v1254
    %1693 = vmatpush.bf16.msra.mxu0 %v1250
    %1694 = vmatmul.bf16.gmra.mxu0 %v342
    %v1695 = vpop.f32.mrf.mxu0
    %v1696 = vadd.f32 %v1683, %v1695
    %v1697 = vpop.f32.mrf.mxu0
    %1698 = vdwg.mxu0
    %1699 = vmatpush.bf16.msra.mxu0 %v1310
    %1700 = vmatpush.bf16.msra.mxu0 %v1306
    %1701 = vmatpush.bf16.msra.mxu0 %v1302
    %1702 = vmatpush.bf16.msra.mxu0 %v1298
    %1703 = vmatpush.bf16.msra.mxu0 %v1294
    %1704 = vmatpush.bf16.msra.mxu0 %v1290
    %1705 = vmatpush.bf16.msra.mxu0 %v1286
    %1706 = vmatpush.bf16.msra.mxu0 %v1282
    %1707 = vmatmul.bf16.gmra.mxu0 %v343
    %v1708 = vpop.f32.mrf.mxu0
    %v1709 = vadd.f32 %v1696, %v1708
    %v1710 = vpop.f32.mrf.mxu0
    %1711 = vdwg.mxu0
    %1712 = vmatpush.bf16.msra.mxu0 %v1342
    %1713 = vmatpush.bf16.msra.mxu0 %v1338
    %1714 = vmatpush.bf16.msra.mxu0 %v1334
    %1715 = vmatpush.bf16.msra.mxu0 %v1330
    %1716 = vmatpush.bf16.msra.mxu0 %v1326
    %1717 = vmatpush.bf16.msra.mxu0 %v1322
    %1718 = vmatpush.bf16.msra.mxu0 %v1318
    %1719 = vmatpush.bf16.msra.mxu0 %v1314
    %1720 = vmatmul.bf16.gmra.mxu0 %v344
    %v1721 = vpop.f32.mrf.mxu0
    %v1722 = vadd.f32 %v1709, %v1721
    %v1723 = vpop.f32.mrf.mxu0
    %1724 = vdwg.mxu0
    %1725 = vmatpush.bf16.msra.mxu0 %v1374
    %1726 = vmatpush.bf16.msra.mxu0 %v1370
    %1727 = vmatpush.bf16.msra.mxu0 %v1366
    %1728 = vmatpush.bf16.msra.mxu0 %v1362
    %1729 = vmatpush.bf16.msra.mxu0 %v1358
    %1730 = vmatpush.bf16.msra.mxu0 %v1354
    %1731 = vmatpush.bf16.msra.mxu0 %v1350
    %1732 = vmatpush.bf16.msra.mxu0 %v1346
    %1733 = vmatmul.bf16.gmra.mxu0 %v345
    %v1734 = vpop.f32.mrf.mxu0
    %v1735 = vadd.f32 %v1722, %v1734
    %v1736 = vpop.f32.mrf.mxu0
    %1737 = vdwg.mxu0
    %1738 = vmatpush.bf16.msra.mxu0 %v1151
    %1739 = vmatpush.bf16.msra.mxu0 %v1147
    %1740 = vmatpush.bf16.msra.mxu0 %v1143
    %1741 = vmatpush.bf16.msra.mxu0 %v1139
    %1742 = vmatpush.bf16.msra.mxu0 %v1135
    %1743 = vmatpush.bf16.msra.mxu0 %v1131
    %1744 = vmatpush.bf16.msra.mxu0 %v1127
    %1745 = vmatpush.bf16.msra.mxu0 %v1123
    %1746 = vmatmul.bf16.gmra.mxu0 %v338
    %v1747 = vpop.f32.mrf.mxu0
    %v1748 = vadd.f32 %v329, %v1747
    %v1749 = vpop.f32.mrf.mxu0
    %1750 = vdwg.mxu0
    %1751 = vmatpush.bf16.msra.mxu0 %v1183
    %1752 = vmatpush.bf16.msra.mxu0 %v1179
    %1753 = vmatpush.bf16.msra.mxu0 %v1175
    %1754 = vmatpush.bf16.msra.mxu0 %v1171
    %1755 = vmatpush.bf16.msra.mxu0 %v1167
    %1756 = vmatpush.bf16.msra.mxu0 %v1163
    %1757 = vmatpush.bf16.msra.mxu0 %v1159
    %1758 = vmatpush.bf16.msra.mxu0 %v1155
    %1759 = vmatmul.bf16.gmra.mxu0 %v339
    %v1760 = vpop.f32.mrf.mxu0
    %v1761 = vadd.f32 %v1748, %v1760
    %v1762 = vpop.f32.mrf.mxu0
    %1763 = vdwg.mxu0
    %1764 = vmatpush.bf16.msra.mxu0 %v1215
    %1765 = vmatpush.bf16.msra.mxu0 %v1211
    %1766 = vmatpush.bf16.msra.mxu0 %v1207
    %1767 = vmatpush.bf16.msra.mxu0 %v1203
    %1768 = vmatpush.bf16.msra.mxu0 %v1199
    %1769 = vmatpush.bf16.msra.mxu0 %v1195
    %1770 = vmatpush.bf16.msra.mxu0 %v1191
    %1771 = vmatpush.bf16.msra.mxu0 %v1187
    %1772 = vmatmul.bf16.gmra.mxu0 %v340
    %v1773 = vpop.f32.mrf.mxu0
    %v1774 = vadd.f32 %v1761, %v1773
    %v1775 = vpop.f32.mrf.mxu0
    %1776 = vdwg.mxu0
    %1777 = vmatpush.bf16.msra.mxu0 %v1247
    %1778 = vmatpush.bf16.msra.mxu0 %v1243
    %1779 = vmatpush.bf16.msra.mxu0 %v1239
    %1780 = vmatpush.bf16.msra.mxu0 %v1235
    %1781 = vmatpush.bf16.msra.mxu0 %v1231
    %1782 = vmatpush.bf16.msra.mxu0 %v1227
    %1783 = vmatpush.bf16.msra.mxu0 %v1223
    %1784 = vmatpush.bf16.msra.mxu0 %v1219
    %1785 = vmatmul.bf16.gmra.mxu0 %v341
    %v1786 = vpop.f32.mrf.mxu0
    %v1787 = vadd.f32 %v1774, %v1786
    %v1788 = vpop.f32.mrf.mxu0
    %1789 = vdwg.mxu0
    %1790 = vmatpush.bf16.msra.mxu0 %v1279
    %1791 = vmatpush.bf16.msra.mxu0 %v1275
    %1792 = vmatpush.bf16.msra.mxu0 %v1271
    %1793 = vmatpush.bf16.msra.mxu0 %v1267
    %1794 = vmatpush.bf16.msra.mxu0 %v1263
    %1795 = vmatpush.bf16.msra.mxu0 %v1259
    %1796 = vmatpush.bf16.msra.mxu0 %v1255
    %1797 = vmatpush.bf16.msra.mxu0 %v1251
    %1798 = vmatmul.bf16.gmra.mxu0 %v342
    %v1799 = vpop.f32.mrf.mxu0
    %v1800 = vadd.f32 %v1787, %v1799
    %v1801 = vpop.f32.mrf.mxu0
    %1802 = vdwg.mxu0
    %1803 = vmatpush.bf16.msra.mxu0 %v1311
    %1804 = vmatpush.bf16.msra.mxu0 %v1307
    %1805 = vmatpush.bf16.msra.mxu0 %v1303
    %1806 = vmatpush.bf16.msra.mxu0 %v1299
    %1807 = vmatpush.bf16.msra.mxu0 %v1295
    %1808 = vmatpush.bf16.msra.mxu0 %v1291
    %1809 = vmatpush.bf16.msra.mxu0 %v1287
    %1810 = vmatpush.bf16.msra.mxu0 %v1283
    %1811 = vmatmul.bf16.gmra.mxu0 %v343
    %v1812 = vpop.f32.mrf.mxu0
    %v1813 = vadd.f32 %v1800, %v1812
    %v1814 = vpop.f32.mrf.mxu0
    %1815 = vdwg.mxu0
    %1816 = vmatpush.bf16.msra.mxu0 %v1343
    %1817 = vmatpush.bf16.msra.mxu0 %v1339
    %1818 = vmatpush.bf16.msra.mxu0 %v1335
    %1819 = vmatpush.bf16.msra.mxu0 %v1331
    %1820 = vmatpush.bf16.msra.mxu0 %v1327
    %1821 = vmatpush.bf16.msra.mxu0 %v1323
    %1822 = vmatpush.bf16.msra.mxu0 %v1319
    %1823 = vmatpush.bf16.msra.mxu0 %v1315
    %1824 = vmatmul.bf16.gmra.mxu0 %v344
    %v1825 = vpop.f32.mrf.mxu0
    %v1826 = vadd.f32 %v1813, %v1825
    %v1827 = vpop.f32.mrf.mxu0
    %1828 = vdwg.mxu0
    %1829 = vmatpush.bf16.msra.mxu0 %v1375
    %1830 = vmatpush.bf16.msra.mxu0 %v1371
    %1831 = vmatpush.bf16.msra.mxu0 %v1367
    %1832 = vmatpush.bf16.msra.mxu0 %v1363
    %1833 = vmatpush.bf16.msra.mxu0 %v1359
    %1834 = vmatpush.bf16.msra.mxu0 %v1355
    %1835 = vmatpush.bf16.msra.mxu0 %v1351
    %1836 = vmatpush.bf16.msra.mxu0 %v1347
    %1837 = vmatmul.bf16.gmra.mxu0 %v345
    %v1838 = vpop.f32.mrf.mxu0
    %v1839 = vadd.f32 %v1826, %v1838
    %v1840 = vpop.f32.mrf.mxu0
    %1841 = vdwg.mxu0
    %1842 = vmatpush.bf16.msra.mxu0 %v1152
    %1843 = vmatpush.bf16.msra.mxu0 %v1148
    %1844 = vmatpush.bf16.msra.mxu0 %v1144
    %1845 = vmatpush.bf16.msra.mxu0 %v1140
    %1846 = vmatpush.bf16.msra.mxu0 %v1136
    %1847 = vmatpush.bf16.msra.mxu0 %v1132
    %1848 = vmatpush.bf16.msra.mxu0 %v1128
    %1849 = vmatpush.bf16.msra.mxu0 %v1124
    %1850 = vmatmul.bf16.gmra.mxu0 %v338
    %v1851 = vpop.f32.mrf.mxu0
    %v1852 = vadd.f32 %v330, %v1851
    %v1853 = vpop.f32.mrf.mxu0
    %1854 = vdwg.mxu0
    %1855 = vmatpush.bf16.msra.mxu0 %v1184
    %1856 = vmatpush.bf16.msra.mxu0 %v1180
    %1857 = vmatpush.bf16.msra.mxu0 %v1176
    %1858 = vmatpush.bf16.msra.mxu0 %v1172
    %1859 = vmatpush.bf16.msra.mxu0 %v1168
    %1860 = vmatpush.bf16.msra.mxu0 %v1164
    %1861 = vmatpush.bf16.msra.mxu0 %v1160
    %1862 = vmatpush.bf16.msra.mxu0 %v1156
    %1863 = vmatmul.bf16.gmra.mxu0 %v339
    %v1864 = vpop.f32.mrf.mxu0
    %v1865 = vadd.f32 %v1852, %v1864
    %v1866 = vpop.f32.mrf.mxu0
    %1867 = vdwg.mxu0
    %1868 = vmatpush.bf16.msra.mxu0 %v1216
    %1869 = vmatpush.bf16.msra.mxu0 %v1212
    %1870 = vmatpush.bf16.msra.mxu0 %v1208
    %1871 = vmatpush.bf16.msra.mxu0 %v1204
    %1872 = vmatpush.bf16.msra.mxu0 %v1200
    %1873 = vmatpush.bf16.msra.mxu0 %v1196
    %1874 = vmatpush.bf16.msra.mxu0 %v1192
    %1875 = vmatpush.bf16.msra.mxu0 %v1188
    %1876 = vmatmul.bf16.gmra.mxu0 %v340
    %v1877 = vpop.f32.mrf.mxu0
    %v1878 = vadd.f32 %v1865, %v1877
    %v1879 = vpop.f32.mrf.mxu0
    %1880 = vdwg.mxu0
    %1881 = vmatpush.bf16.msra.mxu0 %v1248
    %1882 = vmatpush.bf16.msra.mxu0 %v1244
    %1883 = vmatpush.bf16.msra.mxu0 %v1240
    %1884 = vmatpush.bf16.msra.mxu0 %v1236
    %1885 = vmatpush.bf16.msra.mxu0 %v1232
    %1886 = vmatpush.bf16.msra.mxu0 %v1228
    %1887 = vmatpush.bf16.msra.mxu0 %v1224
    %1888 = vmatpush.bf16.msra.mxu0 %v1220
    %1889 = vmatmul.bf16.gmra.mxu0 %v341
    %v1890 = vpop.f32.mrf.mxu0
    %v1891 = vadd.f32 %v1878, %v1890
    %v1892 = vpop.f32.mrf.mxu0
    %1893 = vdwg.mxu0
    %1894 = vmatpush.bf16.msra.mxu0 %v1280
    %1895 = vmatpush.bf16.msra.mxu0 %v1276
    %1896 = vmatpush.bf16.msra.mxu0 %v1272
    %1897 = vmatpush.bf16.msra.mxu0 %v1268
    %1898 = vmatpush.bf16.msra.mxu0 %v1264
    %1899 = vmatpush.bf16.msra.mxu0 %v1260
    %1900 = vmatpush.bf16.msra.mxu0 %v1256
    %1901 = vmatpush.bf16.msra.mxu0 %v1252
    %1902 = vmatmul.bf16.gmra.mxu0 %v342
    %v1903 = vpop.f32.mrf.mxu0
    %v1904 = vadd.f32 %v1891, %v1903
    %v1905 = vpop.f32.mrf.mxu0
    %1906 = vdwg.mxu0
    %1907 = vmatpush.bf16.msra.mxu0 %v1312
    %1908 = vmatpush.bf16.msra.mxu0 %v1308
    %1909 = vmatpush.bf16.msra.mxu0 %v1304
    %1910 = vmatpush.bf16.msra.mxu0 %v1300
    %1911 = vmatpush.bf16.msra.mxu0 %v1296
    %1912 = vmatpush.bf16.msra.mxu0 %v1292
    %1913 = vmatpush.bf16.msra.mxu0 %v1288
    %1914 = vmatpush.bf16.msra.mxu0 %v1284
    %1915 = vmatmul.bf16.gmra.mxu0 %v343
    %v1916 = vpop.f32.mrf.mxu0
    %v1917 = vadd.f32 %v1904, %v1916
    %v1918 = vpop.f32.mrf.mxu0
    %1919 = vdwg.mxu0
    %1920 = vmatpush.bf16.msra.mxu0 %v1344
    %1921 = vmatpush.bf16.msra.mxu0 %v1340
    %1922 = vmatpush.bf16.msra.mxu0 %v1336
    %1923 = vmatpush.bf16.msra.mxu0 %v1332
    %1924 = vmatpush.bf16.msra.mxu0 %v1328
    %1925 = vmatpush.bf16.msra.mxu0 %v1324
    %1926 = vmatpush.bf16.msra.mxu0 %v1320
    %1927 = vmatpush.bf16.msra.mxu0 %v1316
    %1928 = vmatmul.bf16.gmra.mxu0 %v344
    %v1929 = vpop.f32.mrf.mxu0
    %v1930 = vadd.f32 %v1917, %v1929
    %v1931 = vpop.f32.mrf.mxu0
    %1932 = vdwg.mxu0
    %1933 = vmatpush.bf16.msra.mxu0 %v1376
    %1934 = vmatpush.bf16.msra.mxu0 %v1372
    %1935 = vmatpush.bf16.msra.mxu0 %v1368
    %1936 = vmatpush.bf16.msra.mxu0 %v1364
    %1937 = vmatpush.bf16.msra.mxu0 %v1360
    %1938 = vmatpush.bf16.msra.mxu0 %v1356
    %1939 = vmatpush.bf16.msra.mxu0 %v1352
    %1940 = vmatpush.bf16.msra.mxu0 %v1348
    %1941 = vmatmul.bf16.gmra.mxu0 %v345
    %v1942 = vpop.f32.mrf.mxu0
    %v1943 = vadd.f32 %v1930, %v1942
    %v1944 = vpop.f32.mrf.mxu0
    %1945 = vdwg.mxu0
    %1946 = vmatpush.bf16.msra.mxu0 %v1153
    %1947 = vmatpush.bf16.msra.mxu0 %v1149
    %1948 = vmatpush.bf16.msra.mxu0 %v1145
    %1949 = vmatpush.bf16.msra.mxu0 %v1141
    %1950 = vmatpush.bf16.msra.mxu0 %v1137
    %1951 = vmatpush.bf16.msra.mxu0 %v1133
    %1952 = vmatpush.bf16.msra.mxu0 %v1129
    %1953 = vmatpush.bf16.msra.mxu0 %v1125
    %1954 = vmatmul.bf16.gmra.mxu0 %v338
    %v1955 = vpop.f32.mrf.mxu0
    %v1956 = vadd.f32 %v331, %v1955
    %v1957 = vpop.f32.mrf.mxu0
    %1958 = vdwg.mxu0
    %1959 = vmatpush.bf16.msra.mxu0 %v1185
    %1960 = vmatpush.bf16.msra.mxu0 %v1181
    %1961 = vmatpush.bf16.msra.mxu0 %v1177
    %1962 = vmatpush.bf16.msra.mxu0 %v1173
    %1963 = vmatpush.bf16.msra.mxu0 %v1169
    %1964 = vmatpush.bf16.msra.mxu0 %v1165
    %1965 = vmatpush.bf16.msra.mxu0 %v1161
    %1966 = vmatpush.bf16.msra.mxu0 %v1157
    %1967 = vmatmul.bf16.gmra.mxu0 %v339
    %v1968 = vpop.f32.mrf.mxu0
    %v1969 = vadd.f32 %v1956, %v1968
    %v1970 = vpop.f32.mrf.mxu0
    %1971 = vdwg.mxu0
    %1972 = vmatpush.bf16.msra.mxu0 %v1217
    %1973 = vmatpush.bf16.msra.mxu0 %v1213
    %1974 = vmatpush.bf16.msra.mxu0 %v1209
    %1975 = vmatpush.bf16.msra.mxu0 %v1205
    %1976 = vmatpush.bf16.msra.mxu0 %v1201
    %1977 = vmatpush.bf16.msra.mxu0 %v1197
    %1978 = vmatpush.bf16.msra.mxu0 %v1193
    %1979 = vmatpush.bf16.msra.mxu0 %v1189
    %1980 = vmatmul.bf16.gmra.mxu0 %v340
    %v1981 = vpop.f32.mrf.mxu0
    %v1982 = vadd.f32 %v1969, %v1981
    %v1983 = vpop.f32.mrf.mxu0
    %1984 = vdwg.mxu0
    %1985 = vmatpush.bf16.msra.mxu0 %v1249
    %1986 = vmatpush.bf16.msra.mxu0 %v1245
    %1987 = vmatpush.bf16.msra.mxu0 %v1241
    %1988 = vmatpush.bf16.msra.mxu0 %v1237
    %1989 = vmatpush.bf16.msra.mxu0 %v1233
    %1990 = vmatpush.bf16.msra.mxu0 %v1229
    %1991 = vmatpush.bf16.msra.mxu0 %v1225
    %1992 = vmatpush.bf16.msra.mxu0 %v1221
    %1993 = vmatmul.bf16.gmra.mxu0 %v341
    %v1994 = vpop.f32.mrf.mxu0
    %v1995 = vadd.f32 %v1982, %v1994
    %v1996 = vpop.f32.mrf.mxu0
    %1997 = vdwg.mxu0
    %1998 = vmatpush.bf16.msra.mxu0 %v1281
    %1999 = vmatpush.bf16.msra.mxu0 %v1277
    %2000 = vmatpush.bf16.msra.mxu0 %v1273
    %2001 = vmatpush.bf16.msra.mxu0 %v1269
    %2002 = vmatpush.bf16.msra.mxu0 %v1265
    %2003 = vmatpush.bf16.msra.mxu0 %v1261
    %2004 = vmatpush.bf16.msra.mxu0 %v1257
    %2005 = vmatpush.bf16.msra.mxu0 %v1253
    %2006 = vmatmul.bf16.gmra.mxu0 %v342
    %v2007 = vpop.f32.mrf.mxu0
    %v2008 = vadd.f32 %v1995, %v2007
    %v2009 = vpop.f32.mrf.mxu0
    %2010 = vdwg.mxu0
    %2011 = vmatpush.bf16.msra.mxu0 %v1313
    %2012 = vmatpush.bf16.msra.mxu0 %v1309
    %2013 = vmatpush.bf16.msra.mxu0 %v1305
    %2014 = vmatpush.bf16.msra.mxu0 %v1301
    %2015 = vmatpush.bf16.msra.mxu0 %v1297
    %2016 = vmatpush.bf16.msra.mxu0 %v1293
    %2017 = vmatpush.bf16.msra.mxu0 %v1289
    %2018 = vmatpush.bf16.msra.mxu0 %v1285
    %2019 = vmatmul.bf16.gmra.mxu0 %v343
    %v2020 = vpop.f32.mrf.mxu0
    %v2021 = vadd.f32 %v2008, %v2020
    %v2022 = vpop.f32.mrf.mxu0
    %2023 = vdwg.mxu0
    %2024 = vmatpush.bf16.msra.mxu0 %v1345
    %2025 = vmatpush.bf16.msra.mxu0 %v1341
    %2026 = vmatpush.bf16.msra.mxu0 %v1337
    %2027 = vmatpush.bf16.msra.mxu0 %v1333
    %2028 = vmatpush.bf16.msra.mxu0 %v1329
    %2029 = vmatpush.bf16.msra.mxu0 %v1325
    %2030 = vmatpush.bf16.msra.mxu0 %v1321
    %2031 = vmatpush.bf16.msra.mxu0 %v1317
    %2032 = vmatmul.bf16.gmra.mxu0 %v344
    %v2033 = vpop.f32.mrf.mxu0
    %v2034 = vadd.f32 %v2021, %v2033
    %v2035 = vpop.f32.mrf.mxu0
    %2036 = vdwg.mxu0
    %2037 = vmatpush.bf16.msra.mxu0 %v1377
    %2038 = vmatpush.bf16.msra.mxu0 %v1373
    %2039 = vmatpush.bf16.msra.mxu0 %v1369
    %2040 = vmatpush.bf16.msra.mxu0 %v1365
    %2041 = vmatpush.bf16.msra.mxu0 %v1361
    %2042 = vmatpush.bf16.msra.mxu0 %v1357
    %2043 = vmatpush.bf16.msra.mxu0 %v1353
    %2044 = vmatpush.bf16.msra.mxu0 %v1349
    %2045 = vmatmul.bf16.gmra.mxu0 %v345
    %v2046 = vpop.f32.mrf.mxu0
    %v2047 = vadd.f32 %v2034, %v2046
    %v2048 = vpop.f32.mrf.mxu0
    %2049 = vdwg.mxu0
    %v2050 = vmax.f32 %v1735, 0.0
    %v2051 = vmax.f32 %v1839, 0.0
    %v2052 = vmax.f32 %v1943, 0.0
    %v2053 = vmax.f32 %v2047, 0.0
    %v2054 = vpack.c.bf16 %v2050, %v2050
    %v2055 = vpack.c.bf16 %v2051, %v2051
    %v2056 = vpack.c.bf16 %v2052, %v2052
    %v2057 = vpack.c.bf16 %v2053, %v2053
    %v2058 = vld [vmem:[#allocation5] sm:$0xf]
    %v2059 = vld [vmem:[#allocation5 + $0x4] sm:$0xf]
    %v2060 = vld [vmem:[#allocation5 + $0x8] sm:$0xf]
    %v2061 = vld [vmem:[#allocation5 + $0xc] sm:$0xf]
    %v2062 = vld [vmem:[#allocation5 + $0x10] sm:$0xf]
    %v2063 = vld [vmem:[#allocation5 + $0x14] sm:$0xf]
    %v2064 = vld [vmem:[#allocation5 + $0x18] sm:$0xf]
    %v2065 = vld [vmem:[#allocation5 + $0x1c] sm:$0xf]
    %v2066 = vld [vmem:[#allocation5 + $0x20] sm:$0xf]
    %v2067 = vld [vmem:[#allocation5 + $0x24] sm:$0xf]
    %v2068 = vld [vmem:[#allocation5 + $0x28] sm:$0xf]
    %v2069 = vld [vmem:[#allocation5 + $0x2c] sm:$0xf]
    %v2070 = vld [vmem:[#allocation5 + $0x30] sm:$0xf]
    %v2071 = vld [vmem:[#allocation5 + $0x34] sm:$0xf]
    %v2072 = vld [vmem:[#allocation5 + $0x38] sm:$0xf]
    %v2073 = vld [vmem:[#allocation5 + $0x3c] sm:$0xf]
    %v2074 = vld [vmem:[#allocation5 + $0x40] sm:$0xf]
    %v2075 = vld [vmem:[#allocation5 + $0x44] sm:$0xf]
    %v2076 = vld [vmem:[#allocation5 + $0x48] sm:$0xf]
    %v2077 = vld [vmem:[#allocation5 + $0x4c] sm:$0xf]
    %v2078 = vld [vmem:[#allocation5 + $0x50] sm:$0xf]
    %v2079 = vld [vmem:[#allocation5 + $0x54] sm:$0xf]
    %v2080 = vld [vmem:[#allocation5 + $0x58] sm:$0xf]
    %v2081 = vld [vmem:[#allocation5 + $0x5c] sm:$0xf]
    %v2082 = vld [vmem:[#allocation5 + $0x60] sm:$0xf]
    %v2083 = vld [vmem:[#allocation5 + $0x64] sm:$0xf]
    %v2084 = vld [vmem:[#allocation5 + $0x68] sm:$0xf]
    %v2085 = vld [vmem:[#allocation5 + $0x6c] sm:$0xf]
    %v2086 = vld [vmem:[#allocation5 + $0x70] sm:$0xf]
    %v2087 = vld [vmem:[#allocation5 + $0x74] sm:$0xf]
    %v2088 = vld [vmem:[#allocation5 + $0x78] sm:$0xf]
    %v2089 = vld [vmem:[#allocation5 + $0x7c] sm:$0xf]
    %v2090 = vld [vmem:[#allocation5 + $0x80] sm:$0xf]
    %v2091 = vld [vmem:[#allocation5 + $0x84] sm:$0xf]
    %v2092 = vld [vmem:[#allocation5 + $0x88] sm:$0xf]
    %v2093 = vld [vmem:[#allocation5 + $0x8c] sm:$0xf]
    %v2094 = vld [vmem:[#allocation5 + $0x90] sm:$0xf]
    %v2095 = vld [vmem:[#allocation5 + $0x94] sm:$0xf]
    %v2096 = vld [vmem:[#allocation5 + $0x98] sm:$0xf]
    %v2097 = vld [vmem:[#allocation5 + $0x9c] sm:$0xf]
    %v2098 = vld [vmem:[#allocation5 + $0xa0] sm:$0xf]
    %v2099 = vld [vmem:[#allocation5 + $0xa4] sm:$0xf]
    %v2100 = vld [vmem:[#allocation5 + $0xa8] sm:$0xf]
    %v2101 = vld [vmem:[#allocation5 + $0xac] sm:$0xf]
    %v2102 = vld [vmem:[#allocation5 + $0xb0] sm:$0xf]
    %v2103 = vld [vmem:[#allocation5 + $0xb4] sm:$0xf]
    %v2104 = vld [vmem:[#allocation5 + $0xb8] sm:$0xf]
    %v2105 = vld [vmem:[#allocation5 + $0xbc] sm:$0xf]
    %v2106 = vld [vmem:[#allocation5 + $0xc0] sm:$0xf]
    %v2107 = vld [vmem:[#allocation5 + $0xc4] sm:$0xf]
    %v2108 = vld [vmem:[#allocation5 + $0xc8] sm:$0xf]
    %v2109 = vld [vmem:[#allocation5 + $0xcc] sm:$0xf]
    %v2110 = vld [vmem:[#allocation5 + $0xd0] sm:$0xf]
    %v2111 = vld [vmem:[#allocation5 + $0xd4] sm:$0xf]
    %v2112 = vld [vmem:[#allocation5 + $0xd8] sm:$0xf]
    %v2113 = vld [vmem:[#allocation5 + $0xdc] sm:$0xf]
    %v2114 = vld [vmem:[#allocation5 + $0xe0] sm:$0xf]
    %v2115 = vld [vmem:[#allocation5 + $0xe4] sm:$0xf]
    %v2116 = vld [vmem:[#allocation5 + $0xe8] sm:$0xf]
    %v2117 = vld [vmem:[#allocation5 + $0xec] sm:$0xf]
    %v2118 = vld [vmem:[#allocation5 + $0xf0] sm:$0xf]
    %v2119 = vld [vmem:[#allocation5 + $0xf4] sm:$0xf]
    %v2120 = vld [vmem:[#allocation5 + $0xf8] sm:$0xf]
    %v2121 = vld [vmem:[#allocation5 + $0xfc] sm:$0xf]
    %v2122 = vld [vmem:[%s6 + $0x1] ss:$0 sm:$0xff]
    %v2187 = vunpack.c.l.b16 %v2058
    %v2188 = vunpack.c.l.b16 %v2059
    %v2189 = vunpack.c.l.b16 %v2060
    %v2190 = vunpack.c.l.b16 %v2061
    %v2191 = vunpack.c.l.b16 %v2062
    %v2192 = vunpack.c.l.b16 %v2063
    %v2193 = vunpack.c.l.b16 %v2064
    %v2194 = vunpack.c.l.b16 %v2065
    %v2195 = vunpack.c.l.b16 %v2066
    %v2196 = vunpack.c.l.b16 %v2067
    %v2197 = vunpack.c.l.b16 %v2068
    %v2198 = vunpack.c.l.b16 %v2069
    %v2199 = vunpack.c.l.b16 %v2070
    %v2200 = vunpack.c.l.b16 %v2071
    %v2201 = vunpack.c.l.b16 %v2072
    %v2202 = vunpack.c.l.b16 %v2073
    %v2203 = vunpack.c.l.b16 %v2074
    %v2204 = vunpack.c.l.b16 %v2075
    %v2205 = vunpack.c.l.b16 %v2076
    %v2206 = vunpack.c.l.b16 %v2077
    %v2207 = vunpack.c.l.b16 %v2078
    %v2208 = vunpack.c.l.b16 %v2079
    %v2209 = vunpack.c.l.b16 %v2080
    %v2210 = vunpack.c.l.b16 %v2081
    %v2211 = vunpack.c.l.b16 %v2082
    %v2212 = vunpack.c.l.b16 %v2083
    %v2213 = vunpack.c.l.b16 %v2084
    %v2214 = vunpack.c.l.b16 %v2085
    %v2215 = vunpack.c.l.b16 %v2086
    %v2216 = vunpack.c.l.b16 %v2087
    %v2217 = vunpack.c.l.b16 %v2088
    %v2218 = vunpack.c.l.b16 %v2089
    %v2219 = vunpack.c.l.b16 %v2090
    %v2220 = vunpack.c.l.b16 %v2091
    %v2221 = vunpack.c.l.b16 %v2092
    %v2222 = vunpack.c.l.b16 %v2093
    %v2223 = vunpack.c.l.b16 %v2094
    %v2224 = vunpack.c.l.b16 %v2095
    %v2225 = vunpack.c.l.b16 %v2096
    %v2226 = vunpack.c.l.b16 %v2097
    %v2227 = vunpack.c.l.b16 %v2098
    %v2228 = vunpack.c.l.b16 %v2099
    %v2229 = vunpack.c.l.b16 %v2100
    %v2230 = vunpack.c.l.b16 %v2101
    %v2231 = vunpack.c.l.b16 %v2102
    %v2232 = vunpack.c.l.b16 %v2103
    %v2233 = vunpack.c.l.b16 %v2104
    %v2234 = vunpack.c.l.b16 %v2105
    %v2235 = vunpack.c.l.b16 %v2106
    %v2236 = vunpack.c.l.b16 %v2107
    %v2237 = vunpack.c.l.b16 %v2108
    %v2238 = vunpack.c.l.b16 %v2109
    %v2239 = vunpack.c.l.b16 %v2110
    %v2240 = vunpack.c.l.b16 %v2111
    %v2241 = vunpack.c.l.b16 %v2112
    %v2242 = vunpack.c.l.b16 %v2113
    %v2243 = vunpack.c.l.b16 %v2114
    %v2244 = vunpack.c.l.b16 %v2115
    %v2245 = vunpack.c.l.b16 %v2116
    %v2246 = vunpack.c.l.b16 %v2117
    %v2247 = vunpack.c.l.b16 %v2118
    %v2248 = vunpack.c.l.b16 %v2119
    %v2249 = vunpack.c.l.b16 %v2120
    %v2250 = vunpack.c.l.b16 %v2121
    %v2251 = vpack.c.b16 %v2188, %v2187
    %v2252 = vpack.c.b16 %v2190, %v2189
    %v2253 = vpack.c.b16 %v2192, %v2191
    %v2254 = vpack.c.b16 %v2194, %v2193
    %v2255 = vpack.c.b16 %v2196, %v2195
    %v2256 = vpack.c.b16 %v2198, %v2197
    %v2257 = vpack.c.b16 %v2200, %v2199
    %v2258 = vpack.c.b16 %v2202, %v2201
    %v2259 = vpack.c.b16 %v2204, %v2203
    %v2260 = vpack.c.b16 %v2206, %v2205
    %v2261 = vpack.c.b16 %v2208, %v2207
    %v2262 = vpack.c.b16 %v2210, %v2209
    %v2263 = vpack.c.b16 %v2212, %v2211
    %v2264 = vpack.c.b16 %v2214, %v2213
    %v2265 = vpack.c.b16 %v2216, %v2215
    %v2266 = vpack.c.b16 %v2218, %v2217
    %v2267 = vpack.c.b16 %v2220, %v2219
    %v2268 = vpack.c.b16 %v2222, %v2221
    %v2269 = vpack.c.b16 %v2224, %v2223
    %v2270 = vpack.c.b16 %v2226, %v2225
    %v2271 = vpack.c.b16 %v2228, %v2227
    %v2272 = vpack.c.b16 %v2230, %v2229
    %v2273 = vpack.c.b16 %v2232, %v2231
    %v2274 = vpack.c.b16 %v2234, %v2233
    %v2275 = vpack.c.b16 %v2236, %v2235
    %v2276 = vpack.c.b16 %v2238, %v2237
    %v2277 = vpack.c.b16 %v2240, %v2239
    %v2278 = vpack.c.b16 %v2242, %v2241
    %v2279 = vpack.c.b16 %v2244, %v2243
    %v2280 = vpack.c.b16 %v2246, %v2245
    %v2281 = vpack.c.b16 %v2248, %v2247
    %v2282 = vpack.c.b16 %v2250, %v2249
    %2315 = vmatpush.bf16.msra.mxu0 %v2258
    %2316 = vmatpush.bf16.msra.mxu0 %v2257
    %2317 = vmatpush.bf16.msra.mxu0 %v2256
    %2318 = vmatpush.bf16.msra.mxu0 %v2255
    %2319 = vmatpush.bf16.msra.mxu0 %v2254
    %2320 = vmatpush.bf16.msra.mxu0 %v2253
    %2321 = vmatpush.bf16.msra.mxu0 %v2252
    %2322 = vmatpush.bf16.msra.mxu0 %v2251
    %2323 = vmatmul.bf16.gmra.mxu0 %v2054
    %v2324 = vpop.f32.mrf.mxu0
    %v2325 = vadd.f32 %v2122, %v2324
    %v2326 = vpop.f32.mrf.mxu0
    %2327 = vdwg.mxu0
    %2328 = vmatpush.bf16.msra.mxu0 %v2266
    %2329 = vmatpush.bf16.msra.mxu0 %v2265
    %2330 = vmatpush.bf16.msra.mxu0 %v2264
    %2331 = vmatpush.bf16.msra.mxu0 %v2263
    %2332 = vmatpush.bf16.msra.mxu0 %v2262
    %2333 = vmatpush.bf16.msra.mxu0 %v2261
    %2334 = vmatpush.bf16.msra.mxu0 %v2260
    %2335 = vmatpush.bf16.msra.mxu0 %v2259
    %2336 = vmatmul.bf16.gmra.mxu0 %v2055
    %v2337 = vpop.f32.mrf.mxu0
    %v2338 = vadd.f32 %v2325, %v2337
    %v2339 = vpop.f32.mrf.mxu0
    %2340 = vdwg.mxu0
    %2341 = vmatpush.bf16.msra.mxu0 %v2274
    %2342 = vmatpush.bf16.msra.mxu0 %v2273
    %2343 = vmatpush.bf16.msra.mxu0 %v2272
    %2344 = vmatpush.bf16.msra.mxu0 %v2271
    %2345 = vmatpush.bf16.msra.mxu0 %v2270
    %2346 = vmatpush.bf16.msra.mxu0 %v2269
    %2347 = vmatpush.bf16.msra.mxu0 %v2268
    %2348 = vmatpush.bf16.msra.mxu0 %v2267
    %2349 = vmatmul.bf16.gmra.mxu0 %v2056
    %v2350 = vpop.f32.mrf.mxu0
    %v2351 = vadd.f32 %v2338, %v2350
    %v2352 = vpop.f32.mrf.mxu0
    %2353 = vdwg.mxu0
    %2354 = vmatpush.bf16.msra.mxu0 %v2282
    %2355 = vmatpush.bf16.msra.mxu0 %v2281
    %2356 = vmatpush.bf16.msra.mxu0 %v2280
    %2357 = vmatpush.bf16.msra.mxu0 %v2279
    %2358 = vmatpush.bf16.msra.mxu0 %v2278
    %2359 = vmatpush.bf16.msra.mxu0 %v2277
    %2360 = vmatpush.bf16.msra.mxu0 %v2276
    %2361 = vmatpush.bf16.msra.mxu0 %v2275
    %2362 = vmatmul.bf16.gmra.mxu0 %v2057
    %v2363 = vpop.f32.mrf.mxu0
    %v2364 = vadd.f32 %v2351, %v2363
    %v2365 = vpop.f32.mrf.mxu0
    %2366 = vdwg.mxu0
    %v2367 = vmax.f32 %v2364, 0.0
    %v2368 = vpack.c.bf16 %v2367, %v2367
    %v2369 = vld [vmem:[%s4] sm:$0xf]
    %v2370 = vld [vmem:[%s4 + $0x4] sm:$0xf]
    %v2371 = vld [vmem:[%s4 + $0x8] sm:$0xf]
    %v2372 = vld [vmem:[%s4 + $0xc] sm:$0xf]
    %v2373 = vld [vmem:[%s4 + $0x10] sm:$0xf]
    %v2374 = vld [vmem:[%s4 + $0x14] sm:$0xf]
    %v2375 = vld [vmem:[%s4 + $0x18] sm:$0xf]
    %v2376 = vld [vmem:[%s4 + $0x1c] sm:$0xf]
    %v2377 = vld [vmem:[%s4 + $0x20] sm:$0xf]
    %v2378 = vld [vmem:[%s4 + $0x24] sm:$0xf]
    %v2379 = vld [vmem:[%s4 + $0x28] sm:$0xf]
    %v2380 = vld [vmem:[%s4 + $0x2c] sm:$0xf]
    %v2381 = vld [vmem:[%s4 + $0x30] sm:$0xf]
    %v2382 = vld [vmem:[%s4 + $0x34] sm:$0xf]
    %v2383 = vld [vmem:[%s4 + $0x38] sm:$0xf]
    %v2384 = vld [vmem:[%s4 + $0x3c] sm:$0xf]
    %v2385 = vld [vmem:[%s6 + $0x2] ss:$0 sm:$0xff]
    %v2402 = vunpack.c.l.b16 %v2369
    %v2403 = vunpack.c.l.b16 %v2370
    %v2404 = vunpack.c.l.b16 %v2371
    %v2405 = vunpack.c.l.b16 %v2372
    %v2406 = vunpack.c.l.b16 %v2373
    %v2407 = vunpack.c.l.b16 %v2374
    %v2408 = vunpack.c.l.b16 %v2375
    %v2409 = vunpack.c.l.b16 %v2376
    %v2410 = vunpack.c.l.b16 %v2377
    %v2411 = vunpack.c.l.b16 %v2378
    %v2412 = vunpack.c.l.b16 %v2379
    %v2413 = vunpack.c.l.b16 %v2380
    %v2414 = vunpack.c.l.b16 %v2381
    %v2415 = vunpack.c.l.b16 %v2382
    %v2416 = vunpack.c.l.b16 %v2383
    %v2417 = vunpack.c.l.b16 %v2384
    %v2418 = vpack.c.b16 %v2403, %v2402
    %v2419 = vpack.c.b16 %v2405, %v2404
    %v2420 = vpack.c.b16 %v2407, %v2406
    %v2421 = vpack.c.b16 %v2409, %v2408
    %v2422 = vpack.c.b16 %v2411, %v2410
    %v2423 = vpack.c.b16 %v2413, %v2412
    %v2424 = vpack.c.b16 %v2415, %v2414
    %v2425 = vpack.c.b16 %v2417, %v2416
    %2434 = vmatpush.bf16.msra.mxu0 %v2425
    %2435 = vmatpush.bf16.msra.mxu0 %v2424
    %2436 = vmatpush.bf16.msra.mxu0 %v2423
    %2437 = vmatpush.bf16.msra.mxu0 %v2422
    %2438 = vmatpush.bf16.msra.mxu0 %v2421
    %2439 = vmatpush.bf16.msra.mxu0 %v2420
    %2440 = vmatpush.bf16.msra.mxu0 %v2419
    %2441 = vmatpush.bf16.msra.mxu0 %v2418
    %2442 = vmatmul.bf16.gmra.mxu0 %v2368
    %v2443 = vpop.f32.mrf.mxu0
    %v2444 = vadd.f32 %v2385, %v2443
    %v2445 = vpop.f32.mrf.mxu0
    %2446 = vdwg.mxu0
    %v2447 = vmax.f32 %v2444, 0.0
    %v2448 = vpack.c.bf16 %v2447, %v2447
    %v2449 = vld [vmem:[%s5] sm:$0xf]
    %v2450 = vld [vmem:[%s5 + $0x4] sm:$0xf]
    %v2451 = vld [vmem:[%s5 + $0x8] sm:$0xf]
    %v2452 = vld [vmem:[%s5 + $0xc] sm:$0xf]
    %v2453 = vld [vmem:[%s6 + $0x3] ss:$0 sm:$0xff]
    %v2458 = vunpack.c.l.b16 %v2449
    %v2459 = vunpack.c.l.b16 %v2450
    %v2460 = vunpack.c.l.b16 %v2451
    %v2461 = vunpack.c.l.b16 %v2452
    %v2462 = vpack.c.b16 %v2459, %v2458
    %v2463 = vpack.c.b16 %v2461, %v2460
    %vm2466 = vcmask 261120
    %v2468 = vsel %vm2466, %v2448, 0
    %2470 = vmatpush.bf16.msra.mxu0 0
    %2471 = vmatpush.bf16.msra.mxu0 0
    %2472 = vmatpush.bf16.msra.mxu0 0
    %2473 = vmatpush.bf16.msra.mxu0 0
    %2474 = vmatpush.bf16.msra.mxu0 0
    %2475 = vmatpush.bf16.msra.mxu0 0
    %2476 = vmatpush.bf16.msra.mxu0 %v2463
    %2477 = vmatpush.bf16.msra.mxu0 %v2462
    %2478 = vmatmul.bf16.gmra.mxu0 %v2468
    %v2479 = vpop.f32.mrf.mxu0
    %v2480 = vadd.f32 %v2453, %v2479
    %v2481 = vpop.f32.mrf.mxu0
    %2482 = vdwg.mxu0
    %v2483 = vmax.f32 %v2480, 0.0
    %v2484 = vpack.c.bf16 %v2483, %v2483
    %v2485 = vld [vmem:[%s1] sm:$0x1]
    %2487 = vst [vmem:[#allocation1] ss:$9 sm:$0xff] %v2485
    %v2488 = vld [vmem:[#allocation1] sm:$0xff]
    %2490 = vrot.lane.b32.xlu0 %v2488, 8
    %v2491 = vpop.permute.xlu0 %2490
    %vm2492 = vcmask 64512
    %v2495 = vsel %vm2492, %v2484, %v2491
    %v2496 = vld [vmem:[%s7] sm:$0xf]
    %v2497 = vld [vmem:[%s7 + $0x4] sm:$0x3]
    %v2498 = vld [vmem:[%s6 + $0x4] ss:$0 sm:$0xff]
    %v2501 = vunpack.c.l.b16 %v2496
    %v2502 = vunpack.c.l.b16 %v2497
    %v2503 = vpack.c.b16 %v2502, %v2501
    %vm2504 = vcmask 97280
    %v2505 = vsel %vm2504, %v2495, 0
    %vm2507 = vcmask 1045504
    %v2509 = vsel %vm2507, %v2503, 0
    %2511 = vmatpush.bf16.msra.mxu0 0
    %2512 = vmatpush.bf16.msra.mxu0 0
    %2513 = vmatpush.bf16.msra.mxu0 0
    %2514 = vmatpush.bf16.msra.mxu0 0
    %2515 = vmatpush.bf16.msra.mxu0 0
    %2516 = vmatpush.bf16.msra.mxu0 0
    %2517 = vmatpush.bf16.msra.mxu0 0
    %2518 = vmatpush.bf16.msra.mxu0 %v2509
    %2519 = vmatmul.bf16.gmra.mxu0 %v2505
    %v2520 = vpop.f32.mrf.mxu0
    %v2521 = vadd.f32 %v2498, %v2520
    %v2522 = vpop.f32.mrf.mxu0
    %2523 = vdwg.mxu0
    %v2524 = vmax.f32 %v2521, 0.0
    %v2525 = vpack.c.bf16 %v2524, %v2524
    %v2526 = vld [vmem:[%s8] sm:$0xf]
    %v2527 = vld [vmem:[%s8 + $0x4] sm:$0xf]
    %v2528 = vld [vmem:[%s8 + $0x8] sm:$0xf]
    %v2529 = vld [vmem:[%s8 + $0xc] sm:$0xf]
    %v2530 = vld [vmem:[%s8 + $0x10] sm:$0xf]
    %v2531 = vld [vmem:[%s8 + $0x14] sm:$0xf]
    %v2532 = vld [vmem:[%s8 + $0x18] sm:$0xf]
    %v2533 = vld [vmem:[%s8 + $0x1c] sm:$0xf]
    %v2534 = vld [vmem:[%s6 + $0x5] ss:$0 sm:$0xff]
    %v2543 = vunpack.c.l.b16 %v2526
    %v2544 = vunpack.c.l.b16 %v2527
    %v2545 = vunpack.c.l.b16 %v2528
    %v2546 = vunpack.c.l.b16 %v2529
    %v2547 = vunpack.c.l.b16 %v2530
    %v2548 = vunpack.c.l.b16 %v2531
    %v2549 = vunpack.c.l.b16 %v2532
    %v2550 = vunpack.c.l.b16 %v2533
    %v2551 = vpack.c.b16 %v2544, %v2543
    %v2552 = vpack.c.b16 %v2546, %v2545
    %v2553 = vpack.c.b16 %v2548, %v2547
    %v2554 = vpack.c.b16 %v2550, %v2549
    %vm2559 = vcmask 523264
    %v2561 = vsel %vm2559, %v2525, 0
    %2563 = vmatpush.bf16.msra.mxu0 0
    %2564 = vmatpush.bf16.msra.mxu0 0
    %2565 = vmatpush.bf16.msra.mxu0 0
    %2566 = vmatpush.bf16.msra.mxu0 0
    %2567 = vmatpush.bf16.msra.mxu0 %v2554
    %2568 = vmatpush.bf16.msra.mxu0 %v2553
    %2569 = vmatpush.bf16.msra.mxu0 %v2552
    %2570 = vmatpush.bf16.msra.mxu0 %v2551
    %2571 = vmatmul.bf16.gmra.mxu0 %v2561
    %v2572 = vpop.f32.mrf.mxu0
    %v2573 = vadd.f32 %v2534, %v2572
    %v2574 = vpop.f32.mrf.mxu0
    %2575 = vdwg.mxu0
    %v2576 = vmax.f32 %v2573, 0.0
    %v2577 = vpack.c.bf16 %v2576, %v2576
    %v2578 = vld [vmem:[%s9] sm:$0xff]
    %v2579 = vld [vmem:[%s9 + $0x8] sm:$0xff]
    %v2580 = vld [vmem:[%s9 + $0x10] sm:$0xff]
    %v2581 = vld [vmem:[%s9 + $0x18] sm:$0xff]
    %s2582 = scalar_lea.vmem %s6, 6
    %v2583 = vld [vmem:[%s2582] ss:$8 sm:$0x3]
    %v2585 = vperm.slane %v2583, 0
    %v2586 = vperm.slane %v2583, 1
    %v2593 = vunpack.c.l.b16 %v2578
    %v2594 = vunpack.c.h.b16 %v2578
    %v2595 = vunpack.c.l.b16 %v2579
    %v2596 = vunpack.c.h.b16 %v2579
    %v2597 = vunpack.c.l.b16 %v2580
    %v2598 = vunpack.c.h.b16 %v2580
    %v2599 = vunpack.c.l.b16 %v2581
    %v2600 = vunpack.c.h.b16 %v2581
    %v2601 = vpack.c.b16 %v2595, %v2593
    %v2602 = vpack.c.b16 %v2596, %v2594
    %v2603 = vpack.c.b16 %v2599, %v2597
    %v2604 = vpack.c.b16 %v2600, %v2598
    %v2610 = vsel %vm2466, %v2577, 0
    %2612 = vmatpush.bf16.msra.mxu0 0
    %2613 = vmatpush.bf16.msra.mxu0 0
    %2614 = vmatpush.bf16.msra.mxu0 0
    %2615 = vmatpush.bf16.msra.mxu0 0
    %2616 = vmatpush.bf16.msra.mxu0 0
    %2617 = vmatpush.bf16.msra.mxu0 0
    %2618 = vmatpush.bf16.msra.mxu0 %v2603
    %2619 = vmatpush.bf16.msra.mxu0 %v2601
    %2620 = vmatmul.bf16.gmra.mxu0 %v2610
    %v2621 = vpop.f32.mrf.mxu0
    %v2622 = vadd.f32 %v2585, %v2621
    %v2623 = vpop.f32.mrf.mxu0
    %2624 = vdwg.mxu0
    %2625 = vmatpush.bf16.msra.mxu0 0
    %2626 = vmatpush.bf16.msra.mxu0 0
    %2627 = vmatpush.bf16.msra.mxu0 0
    %2628 = vmatpush.bf16.msra.mxu0 0
    %2629 = vmatpush.bf16.msra.mxu0 0
    %2630 = vmatpush.bf16.msra.mxu0 0
    %2631 = vmatpush.bf16.msra.mxu0 %v2604
    %2632 = vmatpush.bf16.msra.mxu0 %v2602
    %2633 = vmatmul.bf16.gmra.mxu0 %v2610
    %v2634 = vpop.f32.mrf.mxu0
    %v2635 = vadd.f32 %v2586, %v2634
    %v2636 = vpop.f32.mrf.mxu0
    %2637 = vdwg.mxu0
    %v2638 = vtanh.pop %v2635
    %v2639 = vadd.f32 %v2638, 1.0
    %v2640 = vmul.f32 %v2639, 6.0
    %v2641 = vadd.f32 %v2640, -10.0
    %2642 = vst [vmem:[#allocation7] sm:$0x3] %v2622
    %v2643 = vmul.f32 %v2641, 1.442695
    %v2644 = vpow.pop %v2643
    %2645 = vst [vmem:[#allocation7 + $0x2] sm:$0x3] %v2644
    // Predicated region
    $region50: #{tpu_custom_call.1} parent=1 // pred_check
      _
    $region51: #{tpu_custom_call.1} parent=1 // pred_check_branch
      %2647 = sbr.rel (0) target = $region53
    $region52: #{tpu_custom_call.1} parent=1 // pred_region
      %2649 = vsyncadd [#allocation4], 0
      %s2651 = sshll.u32 [#allocation7], 4
      %s2652 = int_to_ptr.vmem [resolvable:$true] %s2651
      %s2653 = sshll.u32 %s10, 4
      %s2654 = int_to_ptr.hbm [resolvable:$true] %s2653
      %2656 = dma.vmem_to_hbm [thread:$0]  %s2652, 64, %s2654, [#allocation4]
    $region53: #{tpu_custom_call.1} parent=1 // pred_fallthru
      _
    // Predicated region
    $region54: #{tpu_custom_call.1} parent=1 // pred_check
      _
    $region55: #{tpu_custom_call.1} parent=1 // pred_check_branch
      %2658 = sbr.rel (0) target = $region57
    $region56: #{tpu_custom_call.1} parent=1 // pred_region
      %2660 = dma.done [#allocation4], 64
    $region57: #{tpu_custom_call.1} parent=1 // pred_fallthru
      _
    %2661 = vsyncpa [#allocation3], 1
    %2662 = vsyncpa [#allocation6], 1
    %2663 = vsyncpa [#allocation4], 1

</llo_original>
